<compile_context>
chip_gen: v6e
topology: v6e:2x2x1
jax: 0.10.0
libtpu: 0.0.40
codegen_flags: <defaults>
</compile_context>

<pallas_src>
import functools

import jax
import jax.numpy as jnp
from jax import lax
from jax.experimental import pallas as pl
from jax.experimental.pallas import tpu as pltpu


def _double_conv_kernel(x_ref, w1_ref, sh1_ref, w2_ref, sh2_ref, o_ref,
                        xpad1, xpad2, patch, *, d, hb):
    """One batch element: [dilated 3x3 conv + BN shift + ReLU] x 2, fully fused.

    x_ref  : (1, Hp, Wp, Cin) bf16      pooled NHWC input
    w1_ref : (9*Cin, C)      bf16       conv1 im2col weights, BN1 scale folded
    sh1_ref: (1, C)          f32        fused BN1 shift (includes conv1 bias)
    w2_ref : (9*C, C)        bf16       conv2 im2col weights, BN2 scale folded
    sh2_ref: (1, C)          f32        fused BN2 shift (includes conv2 bias)
    o_ref  : (1, Hp*Wp, C)   f32        output, stored straight from the MXU
    xpad1  : VMEM (Hp+2d, Wp+2d, Cin) f32   zero-bordered conv1 input
    xpad2  : VMEM (Hp+2d, Wp+2d, C)   f32   zero-bordered intermediate
    patch  : VMEM (hb, Wp, 9*max(Cin,C)) f32  im2col patch buffer (reused)
    """
    _, Hp, Wp, Cin = x_ref.shape
    C = o_ref.shape[-1]
    n_tiles = Hp // hb

    def zero_borders(ref):
        # Re-zero only the d-wide border strips (interior is overwritten).
        hpad, wpad, cc = ref.shape
        zr = jnp.zeros((d, wpad, cc), ref.dtype)
        zc = jnp.zeros((hpad, d, cc), ref.dtype)
        ref[0:d, :, :] = zr
        ref[hpad - d:hpad, :, :] = zr
        ref[:, 0:d, :] = zc
        ref[:, wpad - d:wpad, :] = zc

    zero_borders(xpad1)
    zero_borders(xpad2)

    # conv1 padded input: interior fully overwritten every grid step.
    xpad1[d:d + Hp, d:d + Wp, :] = x_ref[0].astype(xpad1.dtype)

    def conv_tile(xpad_ref, w_ref, sh_ref, cin, h0):
        """im2col + one bf16 MXU matmul + fused BN shift + ReLU for hb rows."""
        # 9 shifted-window copies into the patch buffer (no value reshapes).
        for ky in range(3):
            for kx in range(3):
                t = ky * 3 + kx
                win = xpad_ref[pl.ds(h0 + ky * d, hb), kx * d:kx * d + Wp, :]
                patch[:, :, t * cin:(t + 1) * cin] = win
        # Single (hb*Wp, 9*cin) @ (9*cin, C) matmul, bf16 operands, f32 acc.
        lhs = patch[:, :, 0:9 * cin].reshape(hb * Wp, 9 * cin)
        acc = jnp.dot(lhs.astype(jnp.bfloat16), w_ref[...],
                      preferred_element_type=jnp.float32)
        return jnp.maximum(acc + sh_ref[...], 0.0)       # (hb*Wp, C) f32

    def conv1_tile(h0):
        y1 = conv_tile(xpad1, w1_ref, sh1_ref, Cin, h0)
        # Intermediate activation stays in VMEM, never touches HBM.
        xpad2[pl.ds(d + h0, hb), d:d + Wp, :] = (
            y1.reshape(hb, Wp, C).astype(xpad2.dtype))

    def conv2_tile(h0):
        y2 = conv_tile(xpad2, w2_ref, sh2_ref, C, h0)
        # Stored straight from the matmul result: zero relayout before the vst.
        o_ref[0, pl.ds(h0 * Wp, hb * Wp), :] = y2.astype(o_ref.dtype)

    if n_tiles == 1:
        conv1_tile(0)
        conv2_tile(0)
    else:
        # All conv1 row-tiles must finish before conv2 reads its halo rows.
        lax.fori_loop(0, n_tiles, lambda t, c: (conv1_tile(t * hb), c)[1], 0)
        lax.fori_loop(0, n_tiles, lambda t, c: (conv2_tile(t * hb), c)[1], 0)


def _pick_hb(Hp, Wp):
    """Largest row-tile with Hp % hb == 0 and roughly <=512 patch rows."""
    hb = max(1, min(Hp, 512 // max(Wp, 1)))
    while Hp % hb != 0:
        hb -= 1
    return hb


def double_conv_pallas(x_nhwc_bf16, w1m, sh1, w2m, sh2, d):
    """x: (N, Hp, Wp, Cin) bf16; w*m: (9*Cin, C)/(9*C, C) bf16; sh*: (1, C) f32."""
    N, Hp, Wp, Cin = x_nhwc_bf16.shape
    C = w1m.shape[-1]
    hb = _pick_hb(Hp, Wp)
    kmax = 9 * max(Cin, C)
    kernel = functools.partial(_double_conv_kernel, d=d, hb=hb)
    return pl.pallas_call(
        kernel,
        out_shape=jax.ShapeDtypeStruct((N, Hp * Wp, C), jnp.float32),
        grid=(N,),
        in_specs=[
            pl.BlockSpec((1, Hp, Wp, Cin), lambda n: (n, 0, 0, 0)),
            pl.BlockSpec((9 * Cin, C), lambda n: (0, 0)),
            pl.BlockSpec((1, C), lambda n: (0, 0)),
            pl.BlockSpec((9 * C, C), lambda n: (0, 0)),
            pl.BlockSpec((1, C), lambda n: (0, 0)),
        ],
        out_specs=pl.BlockSpec((1, Hp * Wp, C), lambda n: (n, 0, 0)),
        scratch_shapes=[
            pltpu.VMEM((Hp + 2 * d, Wp + 2 * d, Cin), jnp.float32),
            pltpu.VMEM((Hp + 2 * d, Wp + 2 * d, C), jnp.float32),
            pltpu.VMEM((hb, Wp, kmax), jnp.float32),
        ],
        compiler_params=pltpu.CompilerParams(
            dimension_semantics=("parallel",)),
    )(x_nhwc_bf16, w1m, sh1, w2m, sh2)


def _fuse_bn_into_conv(w, bias, gamma, beta, mean, var, eps=1e-5):
    """Fold eval-mode BN (+ conv bias) into the conv: returns (w*scale, shift)."""
    scale = gamma / jnp.sqrt(var + eps)
    w_fused = w * scale[None, None, None, :]
    shift = beta + scale * (bias - mean)
    return w_fused, shift[None, :]


def down_forward(x_nchw, params, d):
    """Equivalent of Down.forward: MaxPool2d(2) then DoubleConv (eval-mode BN)."""
    N, Cin, H, W = x_nchw.shape
    Hp, Wp = H // 2, W // 2
    # MaxPool2d(2) + NCHW->NHWC done once as XLA glue on the tiny input.
    x = x_nchw[:, :, :2 * Hp, :2 * Wp].reshape(N, Cin, Hp, 2, Wp, 2).max(axis=(3, 5))
    x = jnp.transpose(x, (0, 2, 3, 1))                     # -> NHWC
    w1f, sh1 = _fuse_bn_into_conv(params["w1"], params["b1"], params["g1"],
                                  params["beta1"], params["m1"], params["v1"])
    w2f, sh2 = _fuse_bn_into_conv(params["w2"], params["b2"], params["g2"],
                                  params["beta2"], params["m2"], params["v2"])
    C = w1f.shape[-1]
    # im2col weight matrices, BN scale folded, bf16 for the MXU fast path.
    w1m = w1f.reshape(9 * Cin, C).astype(jnp.bfloat16)
    w2m = w2f.reshape(9 * C, C).astype(jnp.bfloat16)
    y = double_conv_pallas(x.astype(jnp.bfloat16), w1m, sh1, w2m, sh2, d)
    y = y.reshape(N, Hp, Wp, C)
    return jnp.transpose(y, (0, 3, 1, 2))                  # back to NCHW


def _reference(x_nchw, params, d, eps=1e-5):
    """Pure-JAX f32 reference (eval-mode BN) for validation."""
    x = lax.reduce_window(x_nchw, -jnp.inf, lax.max,
                          (1, 1, 2, 2), (1, 1, 2, 2), "VALID")
    x = jnp.transpose(x, (0, 2, 3, 1))
    dn = ("NHWC", "HWIO", "NHWC")

    def block(x, w, b, g, beta, m, v):
        y = lax.conv_general_dilated(x, w, window_strides=(1, 1),
                                     padding=((d, d), (d, d)),
                                     rhs_dilation=(d, d),
                                     dimension_numbers=dn) + b
        y = (y - m) / jnp.sqrt(v + eps) * g + beta
        return jnp.maximum(y, 0.0)

    x = block(x, params["w1"], params["b1"], params["g1"], params["beta1"],
              params["m1"], params["v1"])
    x = block(x, params["w2"], params["b2"], params["g2"], params["beta2"],
              params["m2"], params["v2"])
    return jnp.transpose(x, (0, 3, 1, 2))


if __name__ == "__main__":
    # Down(in_ch=4, out_ch=8, d): (2, 4, 16, 16) -> pool -> (2, 4, 8, 8) -> (2, 8, 8, 8)
    N, in_ch, out_ch, H, W = 2, 4, 8, 16, 16

    key = jax.random.PRNGKey(0)
    ks = jax.random.split(key, 13)
    x = jax.random.normal(ks[0], (N, in_ch, H, W), jnp.float32)

    params = {
        # conv1: Conv2d(in_ch, out_ch, 3, dilation=d, padding=d) -> BN(out_ch)
        "w1": 0.1 * jax.random.normal(ks[1], (3, 3, in_ch, out_ch), jnp.float32),
        "b1": 0.05 * jax.random.normal(ks[2], (out_ch,), jnp.float32),
        "g1": 1.0 + 0.1 * jax.random.normal(ks[3], (out_ch,), jnp.float32),
        "beta1": 0.1 * jax.random.normal(ks[4], (out_ch,), jnp.float32),
        "m1": 0.1 * jax.random.normal(ks[5], (out_ch,), jnp.float32),
        "v1": 1.0 + 0.1 * jnp.abs(jax.random.normal(ks[6], (out_ch,), jnp.float32)),
        # conv2: Conv2d(out_ch, out_ch, 3, dilation=d, padding=d) -> BN(out_ch)
        "w2": 0.1 * jax.random.normal(ks[7], (3, 3, out_ch, out_ch), jnp.float32),
        "b2": 0.05 * jax.random.normal(ks[8], (out_ch,), jnp.float32),
        "g2": 1.0 + 0.1 * jax.random.normal(ks[9], (out_ch,), jnp.float32),
        "beta2": 0.1 * jax.random.normal(ks[10], (out_ch,), jnp.float32),
        "m2": 0.1 * jax.random.normal(ks[11], (out_ch,), jnp.float32),
        "v2": 1.0 + 0.1 * jnp.abs(jax.random.normal(ks[12], (out_ch,), jnp.float32)),
    }

    for d in (1, 2):   # exercise both the undilated and dilated cases
        out = jax.block_until_ready(down_forward(x, params, d))
        ref = jax.block_until_ready(_reference(x, params, d))
        assert out.shape == (N, out_ch, H // 2, W // 2), out.shape
        max_err = float(jnp.max(jnp.abs(out - ref)))
        # bf16 matmul operands (f32 accumulation) vs. the f32 reference.
        assert jnp.allclose(out, ref, rtol=5e-2, atol=5e-2), max_err

    print("KERNEL_OK")
</pallas_src>

<mosaic_0001>
module attributes {stable_mosaic.version = 11 : i64} {
  func.func @_double_conv_kernel(%arg0: i32, %arg1: memref<1x8x8x4xbf16, #tpu.memory_space<vmem>>, %arg2: memref<36x8xbf16, #tpu.memory_space<vmem>>, %arg3: memref<1x8xf32, #tpu.memory_space<vmem>>, %arg4: memref<72x8xbf16, #tpu.memory_space<vmem>>, %arg5: memref<1x8xf32, #tpu.memory_space<vmem>>, %arg6: memref<1x64x8xf32, #tpu.memory_space<vmem>>, %arg7: memref<10x10x4xf32, #tpu.memory_space<vmem>>, %arg8: memref<10x10x8xf32, #tpu.memory_space<vmem>>, %arg9: memref<8x8x72xf32, #tpu.memory_space<vmem>>) attributes {dimension_semantics = [#tpu.dimension_semantics<parallel>], iteration_bounds = array<i64: 2>, scalar_prefetch = 0 : i64, scratch_operands = 3 : i64, tpu.core_type = #tpu.core_type<tc>, window_params = [{transform_indices = @transform_0, window_bounds = array<i64: 1, 8, 8, 4>}, {pipeline_mode = #tpu.pipeline_mode<synchronous>, transform_indices = @transform_1, window_bounds = array<i64: 36, 8>}, {pipeline_mode = #tpu.pipeline_mode<synchronous>, transform_indices = @transform_2, window_bounds = array<i64: 1, 8>}, {pipeline_mode = #tpu.pipeline_mode<synchronous>, transform_indices = @transform_3, window_bounds = array<i64: 72, 8>}, {pipeline_mode = #tpu.pipeline_mode<synchronous>, transform_indices = @transform_4, window_bounds = array<i64: 1, 8>}, {transform_indices = @transform_5, window_bounds = array<i64: 1, 64, 8>}]} {
    %cst = arith.constant 0.000000e+00 : f32
    %0 = vector.broadcast %cst : f32 to vector<1x10x4xf32>
    %cst_0 = arith.constant 0.000000e+00 : f32
    %1 = vector.broadcast %cst_0 : f32 to vector<10x1x4xf32>
    %c0 = arith.constant 0 : index
    %c0_1 = arith.constant 0 : index
    %c0_2 = arith.constant 0 : index
    %2 = vector.load %arg7[%c0, %c0_1, %c0_2] : memref<10x10x4xf32, #tpu.memory_space<vmem>>, vector<1x10x4xf32>
    tpu.vector_store %arg7[%c0, %c0_1, %c0_2], %0 {strides = array<i32>} : memref<10x10x4xf32, #tpu.memory_space<vmem>>, vector<1x10x4xf32>,
    %c9 = arith.constant 9 : index
    %c0_3 = arith.constant 0 : index
    %c0_4 = arith.constant 0 : index
    %3 = vector.load %arg7[%c9, %c0_3, %c0_4] : memref<10x10x4xf32, #tpu.memory_space<vmem>>, vector<1x10x4xf32>
    tpu.vector_store %arg7[%c9, %c0_3, %c0_4], %0 {strides = array<i32>} : memref<10x10x4xf32, #tpu.memory_space<vmem>>, vector<1x10x4xf32>,
    %c0_5 = arith.constant 0 : index
    %c0_6 = arith.constant 0 : index
    %c0_7 = arith.constant 0 : index
    %4 = vector.load %arg7[%c0_5, %c0_6, %c0_7] : memref<10x10x4xf32, #tpu.memory_space<vmem>>, vector<10x1x4xf32>
    tpu.vector_store %arg7[%c0_5, %c0_6, %c0_7], %1 {strides = array<i32>} : memref<10x10x4xf32, #tpu.memory_space<vmem>>, vector<10x1x4xf32>,
    %c0_8 = arith.constant 0 : index
    %c9_9 = arith.constant 9 : index
    %c0_10 = arith.constant 0 : index
    %5 = vector.load %arg7[%c0_8, %c9_9, %c0_10] : memref<10x10x4xf32, #tpu.memory_space<vmem>>, vector<10x1x4xf32>
    tpu.vector_store %arg7[%c0_8, %c9_9, %c0_10], %1 {strides = array<i32>} : memref<10x10x4xf32, #tpu.memory_space<vmem>>, vector<10x1x4xf32>,
    %cst_11 = arith.constant 0.000000e+00 : f32
    %6 = vector.broadcast %cst_11 : f32 to vector<1x10x8xf32>
    %cst_12 = arith.constant 0.000000e+00 : f32
    %7 = vector.broadcast %cst_12 : f32 to vector<10x1x8xf32>
    %c0_13 = arith.constant 0 : index
    %c0_14 = arith.constant 0 : index
    %c0_15 = arith.constant 0 : index
    %8 = vector.load %arg8[%c0_13, %c0_14, %c0_15] : memref<10x10x8xf32, #tpu.memory_space<vmem>>, vector<1x10x8xf32>
    tpu.vector_store %arg8[%c0_13, %c0_14, %c0_15], %6 {strides = array<i32>} : memref<10x10x8xf32, #tpu.memory_space<vmem>>, vector<1x10x8xf32>,
    %c9_16 = arith.constant 9 : index
    %c0_17 = arith.constant 0 : index
    %c0_18 = arith.constant 0 : index
    %9 = vector.load %arg8[%c9_16, %c0_17, %c0_18] : memref<10x10x8xf32, #tpu.memory_space<vmem>>, vector<1x10x8xf32>
    tpu.vector_store %arg8[%c9_16, %c0_17, %c0_18], %6 {strides = array<i32>} : memref<10x10x8xf32, #tpu.memory_space<vmem>>, vector<1x10x8xf32>,
    %c0_19 = arith.constant 0 : index
    %c0_20 = arith.constant 0 : index
    %c0_21 = arith.constant 0 : index
    %10 = vector.load %arg8[%c0_19, %c0_20, %c0_21] : memref<10x10x8xf32, #tpu.memory_space<vmem>>, vector<10x1x8xf32>
    tpu.vector_store %arg8[%c0_19, %c0_20, %c0_21], %7 {strides = array<i32>} : memref<10x10x8xf32, #tpu.memory_space<vmem>>, vector<10x1x8xf32>,
    %c0_22 = arith.constant 0 : index
    %c9_23 = arith.constant 9 : index
    %c0_24 = arith.constant 0 : index
    %11 = vector.load %arg8[%c0_22, %c9_23, %c0_24] : memref<10x10x8xf32, #tpu.memory_space<vmem>>, vector<10x1x8xf32>
    tpu.vector_store %arg8[%c0_22, %c9_23, %c0_24], %7 {strides = array<i32>} : memref<10x10x8xf32, #tpu.memory_space<vmem>>, vector<10x1x8xf32>,
    %c0_25 = arith.constant 0 : index
    %c0_26 = arith.constant 0 : index
    %c0_27 = arith.constant 0 : index
    %c0_28 = arith.constant 0 : index
    %12 = vector.load %arg1[%c0_25, %c0_26, %c0_27, %c0_28] : memref<1x8x8x4xbf16, #tpu.memory_space<vmem>>, vector<1x8x8x4xbf16>
    %13 = vector.shape_cast %12 : vector<1x8x8x4xbf16> to vector<8x8x4xbf16>
    %14 = arith.extf %13 : vector<8x8x4xbf16> to vector<8x8x4xf32>
    %c1 = arith.constant 1 : index
    %c1_29 = arith.constant 1 : index
    %c0_30 = arith.constant 0 : index
    %15 = vector.load %arg7[%c1, %c1_29, %c0_30] : memref<10x10x4xf32, #tpu.memory_space<vmem>>, vector<8x8x4xf32>
    tpu.vector_store %arg7[%c1, %c1_29, %c0_30], %14 {strides = array<i32>} : memref<10x10x4xf32, #tpu.memory_space<vmem>>, vector<8x8x4xf32>,
    %c0_31 = arith.constant 0 : index
    %c0_32 = arith.constant 0 : index
    %c0_33 = arith.constant 0 : index
    %16 = vector.load %arg7[%c0_31, %c0_32, %c0_33] : memref<10x10x4xf32, #tpu.memory_space<vmem>>, vector<8x8x4xf32>
    %c0_34 = arith.constant 0 : index
    %c0_35 = arith.constant 0 : index
    %c0_36 = arith.constant 0 : index
    %17 = vector.load %arg9[%c0_34, %c0_35, %c0_36] : memref<8x8x72xf32, #tpu.memory_space<vmem>>, vector<8x8x4xf32>
    tpu.vector_store %arg9[%c0_34, %c0_35, %c0_36], %16 {strides = array<i32>} : memref<8x8x72xf32, #tpu.memory_space<vmem>>, vector<8x8x4xf32>,
    %c0_37 = arith.constant 0 : index
    %c1_38 = arith.constant 1 : index
    %c0_39 = arith.constant 0 : index
    %18 = vector.load %arg7[%c0_37, %c1_38, %c0_39] : memref<10x10x4xf32, #tpu.memory_space<vmem>>, vector<8x8x4xf32>
    %c0_40 = arith.constant 0 : index
    %c0_41 = arith.constant 0 : index
    %c4 = arith.constant 4 : index
    %19 = vector.load %arg9[%c0_40, %c0_41, %c4] : memref<8x8x72xf32, #tpu.memory_space<vmem>>, vector<8x8x4xf32>
    tpu.vector_store %arg9[%c0_40, %c0_41, %c4], %18 {strides = array<i32>} : memref<8x8x72xf32, #tpu.memory_space<vmem>>, vector<8x8x4xf32>,
    %c0_42 = arith.constant 0 : index
    %c2 = arith.constant 2 : index
    %c0_43 = arith.constant 0 : index
    %20 = vector.load %arg7[%c0_42, %c2, %c0_43] : memref<10x10x4xf32, #tpu.memory_space<vmem>>, vector<8x8x4xf32>
    %c0_44 = arith.constant 0 : index
    %c0_45 = arith.constant 0 : index
    %c8 = arith.constant 8 : index
    %21 = vector.load %arg9[%c0_44, %c0_45, %c8] : memref<8x8x72xf32, #tpu.memory_space<vmem>>, vector<8x8x4xf32>
    tpu.vector_store %arg9[%c0_44, %c0_45, %c8], %20 {strides = array<i32>} : memref<8x8x72xf32, #tpu.memory_space<vmem>>, vector<8x8x4xf32>,
    %c1_46 = arith.constant 1 : index
    %c0_47 = arith.constant 0 : index
    %c0_48 = arith.constant 0 : index
    %22 = vector.load %arg7[%c1_46, %c0_47, %c0_48] : memref<10x10x4xf32, #tpu.memory_space<vmem>>, vector<8x8x4xf32>
    %c0_49 = arith.constant 0 : index
    %c0_50 = arith.constant 0 : index
    %c12 = arith.constant 12 : index
    %23 = vector.load %arg9[%c0_49, %c0_50, %c12] : memref<8x8x72xf32, #tpu.memory_space<vmem>>, vector<8x8x4xf32>
    tpu.vector_store %arg9[%c0_49, %c0_50, %c12], %22 {strides = array<i32>} : memref<8x8x72xf32, #tpu.memory_space<vmem>>, vector<8x8x4xf32>,
    %c1_51 = arith.constant 1 : index
    %c1_52 = arith.constant 1 : index
    %c0_53 = arith.constant 0 : index
    %24 = vector.load %arg7[%c1_51, %c1_52, %c0_53] : memref<10x10x4xf32, #tpu.memory_space<vmem>>, vector<8x8x4xf32>
    %c0_54 = arith.constant 0 : index
    %c0_55 = arith.constant 0 : index
    %c16 = arith.constant 16 : index
    %25 = vector.load %arg9[%c0_54, %c0_55, %c16] : memref<8x8x72xf32, #tpu.memory_space<vmem>>, vector<8x8x4xf32>
    tpu.vector_store %arg9[%c0_54, %c0_55, %c16], %24 {strides = array<i32>} : memref<8x8x72xf32, #tpu.memory_space<vmem>>, vector<8x8x4xf32>,
    %c1_56 = arith.constant 1 : index
    %c2_57 = arith.constant 2 : index
    %c0_58 = arith.constant 0 : index
    %26 = vector.load %arg7[%c1_56, %c2_57, %c0_58] : memref<10x10x4xf32, #tpu.memory_space<vmem>>, vector<8x8x4xf32>
    %c0_59 = arith.constant 0 : index
    %c0_60 = arith.constant 0 : index
    %c20 = arith.constant 20 : index
    %27 = vector.load %arg9[%c0_59, %c0_60, %c20] : memref<8x8x72xf32, #tpu.memory_space<vmem>>, vector<8x8x4xf32>
    tpu.vector_store %arg9[%c0_59, %c0_60, %c20], %26 {strides = array<i32>} : memref<8x8x72xf32, #tpu.memory_space<vmem>>, vector<8x8x4xf32>,
    %c2_61 = arith.constant 2 : index
    %c0_62 = arith.constant 0 : index
    %c0_63 = arith.constant 0 : index
    %28 = vector.load %arg7[%c2_61, %c0_62, %c0_63] : memref<10x10x4xf32, #tpu.memory_space<vmem>>, vector<8x8x4xf32>
    %c0_64 = arith.constant 0 : index
    %c0_65 = arith.constant 0 : index
    %c24 = arith.constant 24 : index
    %29 = vector.load %arg9[%c0_64, %c0_65, %c24] : memref<8x8x72xf32, #tpu.memory_space<vmem>>, vector<8x8x4xf32>
    tpu.vector_store %arg9[%c0_64, %c0_65, %c24], %28 {strides = array<i32>} : memref<8x8x72xf32, #tpu.memory_space<vmem>>, vector<8x8x4xf32>,
    %c2_66 = arith.constant 2 : index
    %c1_67 = arith.constant 1 : index
    %c0_68 = arith.constant 0 : index
    %30 = vector.load %arg7[%c2_66, %c1_67, %c0_68] : memref<10x10x4xf32, #tpu.memory_space<vmem>>, vector<8x8x4xf32>
    %c0_69 = arith.constant 0 : index
    %c0_70 = arith.constant 0 : index
    %c28 = arith.constant 28 : index
    %31 = vector.load %arg9[%c0_69, %c0_70, %c28] : memref<8x8x72xf32, #tpu.memory_space<vmem>>, vector<8x8x4xf32>
    tpu.vector_store %arg9[%c0_69, %c0_70, %c28], %30 {strides = array<i32>} : memref<8x8x72xf32, #tpu.memory_space<vmem>>, vector<8x8x4xf32>,
    %c2_71 = arith.constant 2 : index
    %c2_72 = arith.constant 2 : index
    %c0_73 = arith.constant 0 : index
    %32 = vector.load %arg7[%c2_71, %c2_72, %c0_73] : memref<10x10x4xf32, #tpu.memory_space<vmem>>, vector<8x8x4xf32>
    %c0_74 = arith.constant 0 : index
    %c0_75 = arith.constant 0 : index
    %c32 = arith.constant 32 : index
    %33 = vector.load %arg9[%c0_74, %c0_75, %c32] : memref<8x8x72xf32, #tpu.memory_space<vmem>>, vector<8x8x4xf32>
    tpu.vector_store %arg9[%c0_74, %c0_75, %c32], %32 {strides = array<i32>} : memref<8x8x72xf32, #tpu.memory_space<vmem>>, vector<8x8x4xf32>,
    %c0_76 = arith.constant 0 : index
    %c0_77 = arith.constant 0 : index
    %c0_78 = arith.constant 0 : index
    %34 = vector.load %arg9[%c0_76, %c0_77, %c0_78] : memref<8x8x72xf32, #tpu.memory_space<vmem>>, vector<8x8x36xf32>
    %35 = vector.shape_cast %34 : vector<8x8x36xf32> to vector<64x36xf32>
    %36 = arith.truncf %35 : vector<64x36xf32> to vector<64x36xbf16>
    %c0_79 = arith.constant 0 : index
    %c0_80 = arith.constant 0 : index
    %37 = vector.load %arg2[%c0_79, %c0_80] : memref<36x8xbf16, #tpu.memory_space<vmem>>, vector<36x8xbf16>
    %cst_81 = arith.constant dense<0.000000e+00> : vector<64x8xf32>
    %38 = tpu.matmul %36, %37, %cst_81 {dimension_numbers = #tpu.dot_dimension_numbers<[1], [0], [0], [1], [0, 0, 1, 1], [], []>} : vector<64x36xbf16>, vector<36x8xbf16>, vector<64x8xf32> -> vector<64x8xf32>
    %c0_82 = arith.constant 0 : index
    %c0_83 = arith.constant 0 : index
    %39 = vector.load %arg3[%c0_82, %c0_83] : memref<1x8xf32, #tpu.memory_space<vmem>>, vector<1x8xf32>
    %40 = vector.broadcast %39 : vector<1x8xf32> to vector<64x8xf32>
    %41 = arith.addf %38, %40 : vector<64x8xf32>
    %cst_84 = arith.constant 0.000000e+00 : f32
    %42 = vector.broadcast %cst_84 : f32 to vector<64x8xf32>
    %43 = arith.maximumf %41, %42 : vector<64x8xf32>
    %44 = vector.shape_cast %43 : vector<64x8xf32> to vector<8x8x8xf32>
    %c1_85 = arith.constant 1 : index
    %c1_86 = arith.constant 1 : index
    %c0_87 = arith.constant 0 : index
    %45 = vector.load %arg8[%c1_85, %c1_86, %c0_87] : memref<10x10x8xf32, #tpu.memory_space<vmem>>, vector<8x8x8xf32>
    tpu.vector_store %arg8[%c1_85, %c1_86, %c0_87], %44 {strides = array<i32>} : memref<10x10x8xf32, #tpu.memory_space<vmem>>, vector<8x8x8xf32>,
    %c0_88 = arith.constant 0 : index
    %c0_89 = arith.constant 0 : index
    %c0_90 = arith.constant 0 : index
    %46 = vector.load %arg8[%c0_88, %c0_89, %c0_90] : memref<10x10x8xf32, #tpu.memory_space<vmem>>, vector<8x8x8xf32>
    %c0_91 = arith.constant 0 : index
    %c0_92 = arith.constant 0 : index
    %c0_93 = arith.constant 0 : index
    %47 = vector.load %arg9[%c0_91, %c0_92, %c0_93] : memref<8x8x72xf32, #tpu.memory_space<vmem>>, vector<8x8x8xf32>
    tpu.vector_store %arg9[%c0_91, %c0_92, %c0_93], %46 {strides = array<i32>} : memref<8x8x72xf32, #tpu.memory_space<vmem>>, vector<8x8x8xf32>,
    %c0_94 = arith.constant 0 : index
    %c1_95 = arith.constant 1 : index
    %c0_96 = arith.constant 0 : index
    %48 = vector.load %arg8[%c0_94, %c1_95, %c0_96] : memref<10x10x8xf32, #tpu.memory_space<vmem>>, vector<8x8x8xf32>
    %c0_97 = arith.constant 0 : index
    %c0_98 = arith.constant 0 : index
    %c8_99 = arith.constant 8 : index
    %49 = vector.load %arg9[%c0_97, %c0_98, %c8_99] : memref<8x8x72xf32, #tpu.memory_space<vmem>>, vector<8x8x8xf32>
    tpu.vector_store %arg9[%c0_97, %c0_98, %c8_99], %48 {strides = array<i32>} : memref<8x8x72xf32, #tpu.memory_space<vmem>>, vector<8x8x8xf32>,
    %c0_100 = arith.constant 0 : index
    %c2_101 = arith.constant 2 : index
    %c0_102 = arith.constant 0 : index
    %50 = vector.load %arg8[%c0_100, %c2_101, %c0_102] : memref<10x10x8xf32, #tpu.memory_space<vmem>>, vector<8x8x8xf32>
    %c0_103 = arith.constant 0 : index
    %c0_104 = arith.constant 0 : index
    %c16_105 = arith.constant 16 : index
    %51 = vector.load %arg9[%c0_103, %c0_104, %c16_105] : memref<8x8x72xf32, #tpu.memory_space<vmem>>, vector<8x8x8xf32>
    tpu.vector_store %arg9[%c0_103, %c0_104, %c16_105], %50 {strides = array<i32>} : memref<8x8x72xf32, #tpu.memory_space<vmem>>, vector<8x8x8xf32>,
    %c1_106 = arith.constant 1 : index
    %c0_107 = arith.constant 0 : index
    %c0_108 = arith.constant 0 : index
    %52 = vector.load %arg8[%c1_106, %c0_107, %c0_108] : memref<10x10x8xf32, #tpu.memory_space<vmem>>, vector<8x8x8xf32>
    %c0_109 = arith.constant 0 : index
    %c0_110 = arith.constant 0 : index
    %c24_111 = arith.constant 24 : index
    %53 = vector.load %arg9[%c0_109, %c0_110, %c24_111] : memref<8x8x72xf32, #tpu.memory_space<vmem>>, vector<8x8x8xf32>
    tpu.vector_store %arg9[%c0_109, %c0_110, %c24_111], %52 {strides = array<i32>} : memref<8x8x72xf32, #tpu.memory_space<vmem>>, vector<8x8x8xf32>,
    %c1_112 = arith.constant 1 : index
    %c1_113 = arith.constant 1 : index
    %c0_114 = arith.constant 0 : index
    %54 = vector.load %arg8[%c1_112, %c1_113, %c0_114] : memref<10x10x8xf32, #tpu.memory_space<vmem>>, vector<8x8x8xf32>
    %c0_115 = arith.constant 0 : index
    %c0_116 = arith.constant 0 : index
    %c32_117 = arith.constant 32 : index
    %55 = vector.load %arg9[%c0_115, %c0_116, %c32_117] : memref<8x8x72xf32, #tpu.memory_space<vmem>>, vector<8x8x8xf32>
    tpu.vector_store %arg9[%c0_115, %c0_116, %c32_117], %54 {strides = array<i32>} : memref<8x8x72xf32, #tpu.memory_space<vmem>>, vector<8x8x8xf32>,
    %c1_118 = arith.constant 1 : index
    %c2_119 = arith.constant 2 : index
    %c0_120 = arith.constant 0 : index
    %56 = vector.load %arg8[%c1_118, %c2_119, %c0_120] : memref<10x10x8xf32, #tpu.memory_space<vmem>>, vector<8x8x8xf32>
    %c0_121 = arith.constant 0 : index
    %c0_122 = arith.constant 0 : index
    %c40 = arith.constant 40 : index
    %57 = vector.load %arg9[%c0_121, %c0_122, %c40] : memref<8x8x72xf32, #tpu.memory_space<vmem>>, vector<8x8x8xf32>
    tpu.vector_store %arg9[%c0_121, %c0_122, %c40], %56 {strides = array<i32>} : memref<8x8x72xf32, #tpu.memory_space<vmem>>, vector<8x8x8xf32>,
    %c2_123 = arith.constant 2 : index
    %c0_124 = arith.constant 0 : index
    %c0_125 = arith.constant 0 : index
    %58 = vector.load %arg8[%c2_123, %c0_124, %c0_125] : memref<10x10x8xf32, #tpu.memory_space<vmem>>, vector<8x8x8xf32>
    %c0_126 = arith.constant 0 : index
    %c0_127 = arith.constant 0 : index
    %c48 = arith.constant 48 : index
    %59 = vector.load %arg9[%c0_126, %c0_127, %c48] : memref<8x8x72xf32, #tpu.memory_space<vmem>>, vector<8x8x8xf32>
    tpu.vector_store %arg9[%c0_126, %c0_127, %c48], %58 {strides = array<i32>} : memref<8x8x72xf32, #tpu.memory_space<vmem>>, vector<8x8x8xf32>,
    %c2_128 = arith.constant 2 : index
    %c1_129 = arith.constant 1 : index
    %c0_130 = arith.constant 0 : index
    %60 = vector.load %arg8[%c2_128, %c1_129, %c0_130] : memref<10x10x8xf32, #tpu.memory_space<vmem>>, vector<8x8x8xf32>
    %c0_131 = arith.constant 0 : index
    %c0_132 = arith.constant 0 : index
    %c56 = arith.constant 56 : index
    %61 = vector.load %arg9[%c0_131, %c0_132, %c56] : memref<8x8x72xf32, #tpu.memory_space<vmem>>, vector<8x8x8xf32>
    tpu.vector_store %arg9[%c0_131, %c0_132, %c56], %60 {strides = array<i32>} : memref<8x8x72xf32, #tpu.memory_space<vmem>>, vector<8x8x8xf32>,
    %c2_133 = arith.constant 2 : index
    %c2_134 = arith.constant 2 : index
    %c0_135 = arith.constant 0 : index
    %62 = vector.load %arg8[%c2_133, %c2_134, %c0_135] : memref<10x10x8xf32, #tpu.memory_space<vmem>>, vector<8x8x8xf32>
    %c0_136 = arith.constant 0 : index
    %c0_137 = arith.constant 0 : index
    %c64 = arith.constant 64 : index
    %63 = vector.load %arg9[%c0_136, %c0_137, %c64] : memref<8x8x72xf32, #tpu.memory_space<vmem>>, vector<8x8x8xf32>
    tpu.vector_store %arg9[%c0_136, %c0_137, %c64], %62 {strides = array<i32>} : memref<8x8x72xf32, #tpu.memory_space<vmem>>, vector<8x8x8xf32>,
    %c0_138 = arith.constant 0 : index
    %c0_139 = arith.constant 0 : index
    %c0_140 = arith.constant 0 : index
    %64 = vector.load %arg9[%c0_138, %c0_139, %c0_140] : memref<8x8x72xf32, #tpu.memory_space<vmem>>, vector<8x8x72xf32>
    %65 = vector.shape_cast %64 : vector<8x8x72xf32> to vector<64x72xf32>
    %66 = arith.truncf %65 : vector<64x72xf32> to vector<64x72xbf16>
    %c0_141 = arith.constant 0 : index
    %c0_142 = arith.constant 0 : index
    %67 = vector.load %arg4[%c0_141, %c0_142] : memref<72x8xbf16, #tpu.memory_space<vmem>>, vector<72x8xbf16>
    %cst_143 = arith.constant dense<0.000000e+00> : vector<64x8xf32>
    %68 = tpu.matmul %66, %67, %cst_143 {dimension_numbers = #tpu.dot_dimension_numbers<[1], [0], [0], [1], [0, 0, 1, 1], [], []>} : vector<64x72xbf16>, vector<72x8xbf16>, vector<64x8xf32> -> vector<64x8xf32>
    %c0_144 = arith.constant 0 : index
    %c0_145 = arith.constant 0 : index
    %69 = vector.load %arg5[%c0_144, %c0_145] : memref<1x8xf32, #tpu.memory_space<vmem>>, vector<1x8xf32>
    %70 = vector.broadcast %69 : vector<1x8xf32> to vector<64x8xf32>
    %71 = arith.addf %68, %70 : vector<64x8xf32>
    %cst_146 = arith.constant 0.000000e+00 : f32
    %72 = vector.broadcast %cst_146 : f32 to vector<64x8xf32>
    %73 = arith.maximumf %71, %72 : vector<64x8xf32>
    %c0_147 = arith.constant 0 : index
    %c0_148 = arith.constant 0 : index
    %c0_149 = arith.constant 0 : index
    %74 = vector.load %arg6[%c0_147, %c0_148, %c0_149] : memref<1x64x8xf32, #tpu.memory_space<vmem>>, vector<1x64x8xf32>
    %75 = vector.shape_cast %74 : vector<1x64x8xf32> to vector<64x8xf32>
    %76 = vector.shape_cast %73 : vector<64x8xf32> to vector<1x64x8xf32>
    tpu.vector_store %arg6[%c0_147, %c0_148, %c0_149], %76 {strides = array<i32>} : memref<1x64x8xf32, #tpu.memory_space<vmem>>, vector<1x64x8xf32>,
    return
  }
  func.func @transform_0(%arg0: i32) -> (i32, i32, i32, i32) {
    %c0_i32 = arith.constant 0 : i32
    %c0_i32_0 = arith.constant 0 : i32
    %c0_i32_1 = arith.constant 0 : i32
    %c0_i32_2 = arith.constant 0 : i32
    return %arg0, %c0_i32, %c0_i32_0, %c0_i32_1 : i32, i32, i32, i32
  }
  func.func @transform_1(%arg0: i32) -> (i32, i32) {
    %c0_i32 = arith.constant 0 : i32
    %c0_i32_0 = arith.constant 0 : i32
    %c0_i32_1 = arith.constant 0 : i32
    return %c0_i32, %c0_i32_0 : i32, i32
  }
  func.func @transform_2(%arg0: i32) -> (i32, i32) {
    %c0_i32 = arith.constant 0 : i32
    %c0_i32_0 = arith.constant 0 : i32
    %c0_i32_1 = arith.constant 0 : i32
    return %c0_i32, %c0_i32_0 : i32, i32
  }
  func.func @transform_3(%arg0: i32) -> (i32, i32) {
    %c0_i32 = arith.constant 0 : i32
    %c0_i32_0 = arith.constant 0 : i32
    %c0_i32_1 = arith.constant 0 : i32
    return %c0_i32, %c0_i32_0 : i32, i32
  }
  func.func @transform_4(%arg0: i32) -> (i32, i32) {
    %c0_i32 = arith.constant 0 : i32
    %c0_i32_0 = arith.constant 0 : i32
    %c0_i32_1 = arith.constant 0 : i32
    return %c0_i32, %c0_i32_0 : i32, i32
  }
  func.func @transform_5(%arg0: i32) -> (i32, i32, i32) {
    %c0_i32 = arith.constant 0 : i32
    %c0_i32_0 = arith.constant 0 : i32
    %c0_i32_1 = arith.constant 0 : i32
    return %arg0, %c0_i32, %c0_i32_0 : i32, i32, i32
  }
}

</mosaic_0001>

<llo_original>
// kernel: tpu_custom_call.1
$region0: #{tpu_custom_call.1}
  #allocation0 [shape = 'u32[]', space=smem, size = 0x4, offset = 0x4, fixed_abs, tag = 'smem constant byte address 0x4 - core index']
  #allocation1 [shape = 'u32[144,128]{1,0:T(1,128)}', space=vmem, size = 0x12000, scoped, tag = 'internal scratch']
  #allocation2 [shape = 'f32[10,10,4]{2,1,0:T(8,128)}', space=vmem, size = 0x14000, scoped, tag = 'scratch operand']
  #allocation3 [shape = 'f32[10,10,8]{2,1,0:T(8,128)}', space=vmem, size = 0x14000, scoped, tag = 'scratch operand']
  #allocation4 [shape = 'f32[8,8,72]{2,1,0:T(8,128)}', space=vmem, size = 0x8000, scoped, tag = 'scratch operand']
  %s0 = inlined_call_operand.vmem [shape: bf16[2,8,8,4], index: 0, kind: input, shape index: {}]
  %s1 = inlined_call_operand.vmem [shape: bf16[36,8], index: 1, kind: input, shape index: {}]
  %s2 = inlined_call_operand.vmem [shape: f32[1,8], index: 2, kind: input, shape index: {}]
  %s3 = inlined_call_operand.vmem [shape: bf16[72,8], index: 3, kind: input, shape index: {}]
  %s4 = inlined_call_operand.vmem [shape: f32[1,8], index: 4, kind: input, shape index: {}]
  %s5 = inlined_call_operand.vmem [shape: f32[2,64,8], index: 5, kind: output, shape index: {}]
  %s6 = sld [smem:[#allocation0]]
  $region53: #{tpu_custom_call.1} parent=0
    _
  %s8 = ssub.s32 1, %s6
  %s9 = scalar_select 0, %s8, %s6
  loop: start=0, step=1, limit=4
  $region2: #{tpu_custom_call.1} parent=0 // loop_pre_header
    _
  $region3: #{tpu_custom_call.1} parent=0 // loop_header
    %s11 = sphi 0, %s15
    %p12 = scmp.ge.s32.totalorder %s11, 4
    %s21 = sphi 0, %s23
    %s24 = sphi 0, %s21
    %s25 = sphi 0, %s24
    %s41 = sphi 0, %s25
    %s45 = sphi 0, %s45
    %s47 = sphi 0, %s45
    %s48 = sphi 0, %s47
    %s62 = sphi 0, %s48
    %s66 = sphi 0, %s66
    %s68 = sphi 0, %s66
    %s69 = sphi 0, %s68
    %s83 = sphi 0, %s69
    %s87 = sphi 0, %s87
    %s89 = sphi 0, %s87
    %s90 = sphi 0, %s89
    %s104 = sphi 0, %s90
    %s108 = sphi 0, %s108
    %s110 = sphi 0, %s108
    %s111 = sphi 0, %s110
    %s125 = sphi 0, %s111
    %s131 = sphi 0, %s133
    %s134 = sphi 0, %s131
    %s135 = sphi 0, %s134
    %s151 = sphi 0, %s135
  $region4: #{tpu_custom_call.1} parent=0 // loop_header_branch
    %14 = sbr.rel (%p12) target = $region8
  $region5: #{tpu_custom_call.1} parent=0 // loop_body
    %s16 = ssub.s32 %s11, 1
    %s17 = ssub.s32 %s11, 2
    %s18 = sadd.s32 %s11, 1
    %s19 = ssub.s32 %s11, %s18
    %p20 = scmp.eq.s32.totalorder %s19, 0
    %s22 = sadd.s32 %s21, 1
    %s23 = scalar_select %p20, %s21, %s22
    %p26 = pneg %p20
    %p27 = scmp.eq.s32.totalorder %s11, 1
    %p28 = por %p26, %p27
    %p29 = scmp.ne.s32.totalorder %s21, %s24
    %p30 = scmp.eq.s32.totalorder %s11, 0
    %p31 = por %p29, %p30
    %p32 = scmp.ne.s32.totalorder %s21, %s24
    %p33 = scmp.eq.s32.totalorder %s16, 1
    %p34 = por %p32, %p33
    %p35 = scmp.ne.s32.totalorder %s24, %s25
    %p36 = scmp.eq.s32.totalorder %s16, 0
    %p37 = por %p35, %p36
    %p38 = scmp.ne.s32.totalorder %s24, %s25
    %p39 = scmp.eq.s32.totalorder %s17, 1
    %p40 = por %p38, %p39
    %p42 = scmp.ne.s32.totalorder %s25, %s41
    %p43 = scmp.eq.s32.totalorder %s17, 0
    %p44 = por %p42, %p43
    %s46 = sadd.s32 %s45, 1
    %p49 = scmp.eq.s32.totalorder %s11, 1
    %p50 = scmp.ne.s32.totalorder %s45, %s47
    %p51 = scmp.eq.s32.totalorder %s11, 0
    %p52 = por %p50, %p51
    %p53 = scmp.ne.s32.totalorder %s45, %s47
    %p54 = scmp.eq.s32.totalorder %s16, 1
    %p55 = por %p53, %p54
    %p56 = scmp.ne.s32.totalorder %s47, %s48
    %p57 = scmp.eq.s32.totalorder %s16, 0
    %p58 = por %p56, %p57
    %p59 = scmp.ne.s32.totalorder %s47, %s48
    %p60 = scmp.eq.s32.totalorder %s17, 1
    %p61 = por %p59, %p60
    %p63 = scmp.ne.s32.totalorder %s48, %s62
    %p64 = scmp.eq.s32.totalorder %s17, 0
    %p65 = por %p63, %p64
    %s67 = sadd.s32 %s66, 1
    %p70 = scmp.eq.s32.totalorder %s11, 1
    %p71 = scmp.ne.s32.totalorder %s66, %s68
    %p72 = scmp.eq.s32.totalorder %s11, 0
    %p73 = por %p71, %p72
    %p74 = scmp.ne.s32.totalorder %s66, %s68
    %p75 = scmp.eq.s32.totalorder %s16, 1
    %p76 = por %p74, %p75
    %p77 = scmp.ne.s32.totalorder %s68, %s69
    %p78 = scmp.eq.s32.totalorder %s16, 0
    %p79 = por %p77, %p78
    %p80 = scmp.ne.s32.totalorder %s68, %s69
    %p81 = scmp.eq.s32.totalorder %s17, 1
    %p82 = por %p80, %p81
    %p84 = scmp.ne.s32.totalorder %s69, %s83
    %p85 = scmp.eq.s32.totalorder %s17, 0
    %p86 = por %p84, %p85
    %s88 = sadd.s32 %s87, 1
    %p91 = scmp.eq.s32.totalorder %s11, 1
    %p92 = scmp.ne.s32.totalorder %s87, %s89
    %p93 = scmp.eq.s32.totalorder %s11, 0
    %p94 = por %p92, %p93
    %p95 = scmp.ne.s32.totalorder %s87, %s89
    %p96 = scmp.eq.s32.totalorder %s16, 1
    %p97 = por %p95, %p96
    %p98 = scmp.ne.s32.totalorder %s89, %s90
    %p99 = scmp.eq.s32.totalorder %s16, 0
    %p100 = por %p98, %p99
    %p101 = scmp.ne.s32.totalorder %s89, %s90
    %p102 = scmp.eq.s32.totalorder %s17, 1
    %p103 = por %p101, %p102
    %p105 = scmp.ne.s32.totalorder %s90, %s104
    %p106 = scmp.eq.s32.totalorder %s17, 0
    %p107 = por %p105, %p106
    %s109 = sadd.s32 %s108, 1
    %p112 = scmp.eq.s32.totalorder %s11, 1
    %p113 = scmp.ne.s32.totalorder %s108, %s110
    %p114 = scmp.eq.s32.totalorder %s11, 0
    %p115 = por %p113, %p114
    %p116 = scmp.ne.s32.totalorder %s108, %s110
    %p117 = scmp.eq.s32.totalorder %s16, 1
    %p118 = por %p116, %p117
    %p119 = scmp.ne.s32.totalorder %s110, %s111
    %p120 = scmp.eq.s32.totalorder %s16, 0
    %p121 = por %p119, %p120
    %p122 = scmp.ne.s32.totalorder %s110, %s111
    %p123 = scmp.eq.s32.totalorder %s17, 1
    %p124 = por %p122, %p123
    %p126 = scmp.ne.s32.totalorder %s111, %s125
    %p127 = scmp.eq.s32.totalorder %s17, 0
    %p128 = por %p126, %p127
    %s129 = ssub.s32 %s11, %s18
    %p130 = scmp.eq.s32.totalorder %s129, 0
    %s132 = sadd.s32 %s131, 1
    %s133 = scalar_select %p130, %s131, %s132
    %p136 = pneg %p130
    %p137 = scmp.eq.s32.totalorder %s11, 1
    %p138 = por %p136, %p137
    %p139 = scmp.ne.s32.totalorder %s131, %s134
    %p140 = scmp.eq.s32.totalorder %s11, 0
    %p141 = por %p139, %p140
    %p142 = scmp.ne.s32.totalorder %s131, %s134
    %p143 = scmp.eq.s32.totalorder %s16, 1
    %p144 = por %p142, %p143
    %p145 = scmp.ne.s32.totalorder %s134, %s135
    %p146 = scmp.eq.s32.totalorder %s16, 0
    %p147 = por %p145, %p146
    %p148 = scmp.ne.s32.totalorder %s134, %s135
    %p149 = scmp.eq.s32.totalorder %s17, 1
    %p150 = por %p148, %p149
    %p152 = scmp.ne.s32.totalorder %s135, %s151
    %p153 = scmp.eq.s32.totalorder %s17, 0
    %p154 = por %p152, %p153
    %p155 = scmp.le.s32.totalorder 1, %s11
    %p156 = scmp.lt.s32.totalorder %s11, 3
    %p157 = pnand %p155, %p156
    %p158 = pneg %p157
    // Predicated region
    $region9: #{tpu_custom_call.1} parent=5 // pred_check
      _
    $region10: #{tpu_custom_call.1} parent=5 // pred_check_branch
      %160 = sbr.rel (%p157) target = $region12
    $region11: #{tpu_custom_call.1} parent=5 // pred_region
      %s161 = ssub.s32 %s11, 1
      // Predicated region
      $region13: #{tpu_custom_call.1} parent=11 // pred_check
        %p162 = pneg %p58
      $region14: #{tpu_custom_call.1} parent=11 // pred_check_branch
        %164 = sbr.rel (%p162) target = $region16
      $region15: #{tpu_custom_call.1} parent=11 // pred_region
        _
      $region16: #{tpu_custom_call.1} parent=11 // pred_fallthru
        _
      // Predicated region
      $region17: #{tpu_custom_call.1} parent=11 // pred_check
        %p165 = pneg %p79
      $region18: #{tpu_custom_call.1} parent=11 // pred_check_branch
        %167 = sbr.rel (%p165) target = $region20
      $region19: #{tpu_custom_call.1} parent=11 // pred_region
        _
      $region20: #{tpu_custom_call.1} parent=11 // pred_fallthru
        _
      // Predicated region
      $region21: #{tpu_custom_call.1} parent=11 // pred_check
        %p168 = pneg %p100
      $region22: #{tpu_custom_call.1} parent=11 // pred_check_branch
        %170 = sbr.rel (%p168) target = $region24
      $region23: #{tpu_custom_call.1} parent=11 // pred_region
        _
      $region24: #{tpu_custom_call.1} parent=11 // pred_fallthru
        _
      // Predicated region
      $region25: #{tpu_custom_call.1} parent=11 // pred_check
        %p171 = pneg %p121
      $region26: #{tpu_custom_call.1} parent=11 // pred_check_branch
        %173 = sbr.rel (%p171) target = $region28
      $region27: #{tpu_custom_call.1} parent=11 // pred_region
        _
      $region28: #{tpu_custom_call.1} parent=11 // pred_fallthru
        _
    $region12: #{tpu_custom_call.1} parent=5 // pred_fallthru
      _
    %p174 = scmp.lt.s32.totalorder %s11, 2
    // Predicated region
    $region29: #{tpu_custom_call.1} parent=5 // pred_check
      %p175 = pneg %p174
    $region30: #{tpu_custom_call.1} parent=5 // pred_check_branch
      %177 = sbr.rel (%p175) target = $region32
    $region31: #{tpu_custom_call.1} parent=5 // pred_region
      // Predicated region
      $region33: #{tpu_custom_call.1} parent=31 // pred_check
        %p178 = pneg %p31
      $region34: #{tpu_custom_call.1} parent=31 // pred_check_branch
        %180 = sbr.rel (%p178) target = $region36
      $region35: #{tpu_custom_call.1} parent=31 // pred_region
        %p181 = scmp.lt.s32.totalorder %s11, 1
        %s182 = scalar_select %p181, %s11, 1
        %s183 = smul.addr %s182, 8
        %s184 = smul.addr %s183, 4
        %s185 = scalar_lea.vmem %s0, %s184
      $region36: #{tpu_custom_call.1} parent=31 // pred_fallthru
        _
    $region32: #{tpu_custom_call.1} parent=5 // pred_fallthru
      _
    %p186 = scmp.le.s32.totalorder 1, %s11
    %p187 = scmp.lt.s32.totalorder %s11, 3
    %p188 = pnand %p186, %p187
    %p189 = pneg %p188
    // Predicated region
    $region37: #{tpu_custom_call.1} parent=5 // pred_check
      _
    $region38: #{tpu_custom_call.1} parent=5 // pred_check_branch
      %191 = sbr.rel (%p188) target = $region40
    $region39: #{tpu_custom_call.1} parent=5 // pred_region
      %s192 = ssub.s32 %s11, 1
      %p193 = scmp.lt.s32.totalorder %s16, 1
      %s194 = scalar_select %p193, %s16, 1
      %s195 = smul.addr %s194, 8
      %s196 = smul.addr %s195, 4
      %s197 = scalar_lea.vmem %s0, %s196
      %p198 = pneg %p37
      %p199 = pneg %p34
      %p200 = pneg %p58
      %p201 = pneg %p55
      %p202 = pneg %p79
      %p203 = pneg %p76
      %p204 = pneg %p100
      %p205 = pneg %p97
      %p206 = pneg %p121
      %p207 = pneg %p118
      %p208 = pneg %p147
      %p209 = pneg %p144
      %p210 = scmp.lt.s32.totalorder %s16, 1
      %s211 = scalar_select %p210, %s16, 1
      %s212 = smul.addr %s211, 8
      %s213 = smul.addr %s212, 8
      %s214 = scalar_lea.vmem %s5, %s213
      %p215 = scmp.lt.s32.totalorder %s16, 1
      %s216 = scalar_select %p215, %s16, 1
      %s217 = smul.addr %s216, 8
      %s218 = smul.addr %s217, 4
      %s219 = scalar_lea.vmem %s0, %s218
      %p220 = scmp.lt.s32.totalorder %s16, 1
      %s221 = scalar_select %p220, %s16, 1
      %s222 = smul.addr %s221, 8
      %s223 = smul.addr %s222, 8
      %s224 = scalar_lea.vmem %s5, %s223
      %vm226 = vcmask 31744
      %227 = vst.msk [vmem:[#allocation2] sm:$0xff] %vm226, 0.0
      %vm228 = vcmask 25600
      %229 = vst.msk [vmem:[#allocation2 + $0x8] sm:$0x3] %vm228, 0.0
      %s230 = scalar_lea.vmem [#allocation2], 144
      %231 = vst.msk [vmem:[%s230] sm:$0xff] %vm226, 0.0
      %232 = vst.msk [vmem:[%s230 + $0x8] sm:$0x3] %vm228, 0.0
      %vm233 = vcmask 24576
      %234 = vst.msk [vmem:[#allocation2] sm:$0x1] %vm233, 0.0
      %235 = vst.msk [vmem:[#allocation2 + $0x10] sm:$0x1] %vm233, 0.0
      %236 = vst.msk [vmem:[#allocation2 + $0x20] sm:$0x1] %vm233, 0.0
      %237 = vst.msk [vmem:[#allocation2 + $0x30] sm:$0x1] %vm233, 0.0
      %238 = vst.msk [vmem:[#allocation2 + $0x40] sm:$0x1] %vm233, 0.0
      %239 = vst.msk [vmem:[#allocation2 + $0x50] sm:$0x1] %vm233, 0.0
      %240 = vst.msk [vmem:[#allocation2 + $0x60] sm:$0x1] %vm233, 0.0
      %241 = vst.msk [vmem:[#allocation2 + $0x70] sm:$0x1] %vm233, 0.0
      %242 = vst.msk [vmem:[#allocation2 + $0x80] sm:$0x1] %vm233, 0.0
      %243 = vst.msk [vmem:[#allocation2 + $0x90] sm:$0x1] %vm233, 0.0
      %244 = vst.msk [vmem:[#allocation2 + $0x9] sm:$0x1] %vm233, 0.0
      %245 = vst.msk [vmem:[#allocation2 + $0x19] sm:$0x1] %vm233, 0.0
      %246 = vst.msk [vmem:[#allocation2 + $0x29] sm:$0x1] %vm233, 0.0
      %247 = vst.msk [vmem:[#allocation2 + $0x39] sm:$0x1] %vm233, 0.0
      %248 = vst.msk [vmem:[#allocation2 + $0x49] sm:$0x1] %vm233, 0.0
      %249 = vst.msk [vmem:[#allocation2 + $0x59] sm:$0x1] %vm233, 0.0
      %250 = vst.msk [vmem:[#allocation2 + $0x69] sm:$0x1] %vm233, 0.0
      %251 = vst.msk [vmem:[#allocation2 + $0x79] sm:$0x1] %vm233, 0.0
      %252 = vst.msk [vmem:[#allocation2 + $0x89] sm:$0x1] %vm233, 0.0
      %253 = vst.msk [vmem:[#allocation2 + $0x99] sm:$0x1] %vm233, 0.0
      %vm254 = vcmask 64512
      %255 = vst.msk [vmem:[#allocation3] sm:$0xff] %vm254, 0.0
      %vm256 = vcmask 58368
      %257 = vst.msk [vmem:[#allocation3 + $0x8] sm:$0x3] %vm256, 0.0
      %s258 = scalar_lea.vmem [#allocation3], 144
      %259 = vst.msk [vmem:[%s258] sm:$0xff] %vm254, 0.0
      %260 = vst.msk [vmem:[%s258 + $0x8] sm:$0x3] %vm256, 0.0
      %vm261 = vcmask 57344
      %262 = vst.msk [vmem:[#allocation3] sm:$0x1] %vm261, 0.0
      %263 = vst.msk [vmem:[#allocation3 + $0x10] sm:$0x1] %vm261, 0.0
      %264 = vst.msk [vmem:[#allocation3 + $0x20] sm:$0x1] %vm261, 0.0
      %265 = vst.msk [vmem:[#allocation3 + $0x30] sm:$0x1] %vm261, 0.0
      %266 = vst.msk [vmem:[#allocation3 + $0x40] sm:$0x1] %vm261, 0.0
      %267 = vst.msk [vmem:[#allocation3 + $0x50] sm:$0x1] %vm261, 0.0
      %268 = vst.msk [vmem:[#allocation3 + $0x60] sm:$0x1] %vm261, 0.0
      %269 = vst.msk [vmem:[#allocation3 + $0x70] sm:$0x1] %vm261, 0.0
      %270 = vst.msk [vmem:[#allocation3 + $0x80] sm:$0x1] %vm261, 0.0
      %271 = vst.msk [vmem:[#allocation3 + $0x90] sm:$0x1] %vm261, 0.0
      %272 = vst.msk [vmem:[#allocation3 + $0x9] sm:$0x1] %vm261, 0.0
      %273 = vst.msk [vmem:[#allocation3 + $0x19] sm:$0x1] %vm261, 0.0
      %274 = vst.msk [vmem:[#allocation3 + $0x29] sm:$0x1] %vm261, 0.0
      %275 = vst.msk [vmem:[#allocation3 + $0x39] sm:$0x1] %vm261, 0.0
      %276 = vst.msk [vmem:[#allocation3 + $0x49] sm:$0x1] %vm261, 0.0
      %277 = vst.msk [vmem:[#allocation3 + $0x59] sm:$0x1] %vm261, 0.0
      %278 = vst.msk [vmem:[#allocation3 + $0x69] sm:$0x1] %vm261, 0.0
      %279 = vst.msk [vmem:[#allocation3 + $0x79] sm:$0x1] %vm261, 0.0
      %280 = vst.msk [vmem:[#allocation3 + $0x89] sm:$0x1] %vm261, 0.0
      %281 = vst.msk [vmem:[#allocation3 + $0x99] sm:$0x1] %vm261, 0.0
      %v282 = vld [vmem:[%s219] sm:$0xf]
      %v283 = vld [vmem:[%s219 + $0x4] sm:$0xf]
      %v284 = vld [vmem:[%s219 + $0x8] sm:$0xf]
      %v285 = vld [vmem:[%s219 + $0xc] sm:$0xf]
      %v286 = vld [vmem:[%s219 + $0x10] sm:$0xf]
      %v287 = vld [vmem:[%s219 + $0x14] sm:$0xf]
      %v288 = vld [vmem:[%s219 + $0x18] sm:$0xf]
      %v289 = vld [vmem:[%s219 + $0x1c] sm:$0xf]
      %v290 = vunpack.c.l.bf16 %v282
      %v291 = vunpack.c.l.bf16 %v283
      %v292 = vunpack.c.l.bf16 %v284
      %v293 = vunpack.c.l.bf16 %v285
      %v294 = vunpack.c.l.bf16 %v286
      %v295 = vunpack.c.l.bf16 %v287
      %v296 = vunpack.c.l.bf16 %v288
      %v297 = vunpack.c.l.bf16 %v289
      %s298 = scalar_lea.vmem [#allocation2], 16
      %299 = vst.msk [vmem:[%s298 + $0x1] sm:$0xff] %vm226, %v290
      %300 = vst.msk [vmem:[%s298 + $0x11] sm:$0xff] %vm226, %v291
      %301 = vst.msk [vmem:[%s298 + $0x21] sm:$0xff] %vm226, %v292
      %302 = vst.msk [vmem:[%s298 + $0x31] sm:$0xff] %vm226, %v293
      %303 = vst.msk [vmem:[%s298 + $0x41] sm:$0xff] %vm226, %v294
      %304 = vst.msk [vmem:[%s298 + $0x51] sm:$0xff] %vm226, %v295
      %305 = vst.msk [vmem:[%s298 + $0x61] sm:$0xff] %vm226, %v296
      %306 = vst.msk [vmem:[%s298 + $0x71] sm:$0xff] %vm226, %v297
      %v307 = vld [vmem:[#allocation2] sm:$0xff]
      %v308 = vld [vmem:[#allocation2 + $0x10] sm:$0xff]
      %v309 = vld [vmem:[#allocation2 + $0x20] sm:$0xff]
      %v310 = vld [vmem:[#allocation2 + $0x30] sm:$0xff]
      %v311 = vld [vmem:[#allocation2 + $0x40] sm:$0xff]
      %v312 = vld [vmem:[#allocation2 + $0x50] sm:$0xff]
      %v313 = vld [vmem:[#allocation2 + $0x60] sm:$0xff]
      %v314 = vld [vmem:[#allocation2 + $0x70] sm:$0xff]
      %315 = vst.msk [vmem:[#allocation4] sm:$0xff] %vm226, %v307
      %316 = vst.msk [vmem:[#allocation4 + $0x8] sm:$0xff] %vm226, %v308
      %317 = vst.msk [vmem:[#allocation4 + $0x10] sm:$0xff] %vm226, %v309
      %318 = vst.msk [vmem:[#allocation4 + $0x18] sm:$0xff] %vm226, %v310
      %319 = vst.msk [vmem:[#allocation4 + $0x20] sm:$0xff] %vm226, %v311
      %320 = vst.msk [vmem:[#allocation4 + $0x28] sm:$0xff] %vm226, %v312
      %321 = vst.msk [vmem:[#allocation4 + $0x30] sm:$0xff] %vm226, %v313
      %322 = vst.msk [vmem:[#allocation4 + $0x38] sm:$0xff] %vm226, %v314
      %v323 = vld [vmem:[#allocation2 + $0x1] sm:$0xff]
      %v324 = vld [vmem:[#allocation2 + $0x11] sm:$0xff]
      %v325 = vld [vmem:[#allocation2 + $0x21] sm:$0xff]
      %v326 = vld [vmem:[#allocation2 + $0x31] sm:$0xff]
      %v327 = vld [vmem:[#allocation2 + $0x41] sm:$0xff]
      %v328 = vld [vmem:[#allocation2 + $0x51] sm:$0xff]
      %v329 = vld [vmem:[#allocation2 + $0x61] sm:$0xff]
      %v330 = vld [vmem:[#allocation2 + $0x71] sm:$0xff]
      %339 = vrot.lane.b32.xlu0 %v323, 4
      %v340 = vpop.permute.xlu0 %339
      %341 = vrot.lane.b32.xlu0 %v324, 4
      %v342 = vpop.permute.xlu0 %341
      %343 = vrot.lane.b32.xlu0 %v325, 4
      %v344 = vpop.permute.xlu0 %343
      %345 = vrot.lane.b32.xlu0 %v326, 4
      %v346 = vpop.permute.xlu0 %345
      %347 = vrot.lane.b32.xlu0 %v327, 4
      %v348 = vpop.permute.xlu0 %347
      %349 = vrot.lane.b32.xlu0 %v328, 4
      %v350 = vpop.permute.xlu0 %349
      %351 = vrot.lane.b32.xlu0 %v329, 4
      %v352 = vpop.permute.xlu0 %351
      %353 = vrot.lane.b32.xlu0 %v330, 4
      %v354 = vpop.permute.xlu0 %353
      %vm363 = vcmask 64544
      %364 = vst.msk [vmem:[#allocation4] sm:$0xff] %vm363, %v340
      %365 = vst.msk [vmem:[#allocation4 + $0x8] sm:$0xff] %vm363, %v342
      %366 = vst.msk [vmem:[#allocation4 + $0x10] sm:$0xff] %vm363, %v344
      %367 = vst.msk [vmem:[#allocation4 + $0x18] sm:$0xff] %vm363, %v346
      %368 = vst.msk [vmem:[#allocation4 + $0x20] sm:$0xff] %vm363, %v348
      %369 = vst.msk [vmem:[#allocation4 + $0x28] sm:$0xff] %vm363, %v350
      %370 = vst.msk [vmem:[#allocation4 + $0x30] sm:$0xff] %vm363, %v352
      %371 = vst.msk [vmem:[#allocation4 + $0x38] sm:$0xff] %vm363, %v354
      %v372 = vld [vmem:[#allocation2 + $0x2] sm:$0xff]
      %v373 = vld [vmem:[#allocation2 + $0x12] sm:$0xff]
      %v374 = vld [vmem:[#allocation2 + $0x22] sm:$0xff]
      %v375 = vld [vmem:[#allocation2 + $0x32] sm:$0xff]
      %v376 = vld [vmem:[#allocation2 + $0x42] sm:$0xff]
      %v377 = vld [vmem:[#allocation2 + $0x52] sm:$0xff]
      %v378 = vld [vmem:[#allocation2 + $0x62] sm:$0xff]
      %v379 = vld [vmem:[#allocation2 + $0x72] sm:$0xff]
      %388 = vrot.lane.b32.xlu0 %v372, 8
      %v389 = vpop.permute.xlu0 %388
      %390 = vrot.lane.b32.xlu0 %v373, 8
      %v391 = vpop.permute.xlu0 %390
      %392 = vrot.lane.b32.xlu0 %v374, 8
      %v393 = vpop.permute.xlu0 %392
      %394 = vrot.lane.b32.xlu0 %v375, 8
      %v395 = vpop.permute.xlu0 %394
      %396 = vrot.lane.b32.xlu0 %v376, 8
      %v397 = vpop.permute.xlu0 %396
      %398 = vrot.lane.b32.xlu0 %v377, 8
      %v399 = vpop.permute.xlu0 %398
      %400 = vrot.lane.b32.xlu0 %v378, 8
      %v401 = vpop.permute.xlu0 %400
      %402 = vrot.lane.b32.xlu0 %v379, 8
      %v403 = vpop.permute.xlu0 %402
      %vm412 = vcmask 97344
      %413 = vst.msk [vmem:[#allocation4] sm:$0xff] %vm412, %v389
      %414 = vst.msk [vmem:[#allocation4 + $0x8] sm:$0xff] %vm412, %v391
      %415 = vst.msk [vmem:[#allocation4 + $0x10] sm:$0xff] %vm412, %v393
      %416 = vst.msk [vmem:[#allocation4 + $0x18] sm:$0xff] %vm412, %v395
      %417 = vst.msk [vmem:[#allocation4 + $0x20] sm:$0xff] %vm412, %v397
      %418 = vst.msk [vmem:[#allocation4 + $0x28] sm:$0xff] %vm412, %v399
      %419 = vst.msk [vmem:[#allocation4 + $0x30] sm:$0xff] %vm412, %v401
      %420 = vst.msk [vmem:[#allocation4 + $0x38] sm:$0xff] %vm412, %v403
      %v421 = vld [vmem:[%s298] sm:$0xff]
      %v422 = vld [vmem:[%s298 + $0x10] sm:$0xff]
      %v423 = vld [vmem:[%s298 + $0x20] sm:$0xff]
      %v424 = vld [vmem:[%s298 + $0x30] sm:$0xff]
      %v425 = vld [vmem:[%s298 + $0x40] sm:$0xff]
      %v426 = vld [vmem:[%s298 + $0x50] sm:$0xff]
      %v427 = vld [vmem:[%s298 + $0x60] sm:$0xff]
      %v428 = vld [vmem:[%s298 + $0x70] sm:$0xff]
      %437 = vrot.lane.b32.xlu0 %v421, 12
      %v438 = vpop.permute.xlu0 %437
      %439 = vrot.lane.b32.xlu0 %v422, 12
      %v440 = vpop.permute.xlu0 %439
      %441 = vrot.lane.b32.xlu0 %v423, 12
      %v442 = vpop.permute.xlu0 %441
      %443 = vrot.lane.b32.xlu0 %v424, 12
      %v444 = vpop.permute.xlu0 %443
      %445 = vrot.lane.b32.xlu0 %v425, 12
      %v446 = vpop.permute.xlu0 %445
      %447 = vrot.lane.b32.xlu0 %v426, 12
      %v448 = vpop.permute.xlu0 %447
      %449 = vrot.lane.b32.xlu0 %v427, 12
      %v450 = vpop.permute.xlu0 %449
      %451 = vrot.lane.b32.xlu0 %v428, 12
      %v452 = vpop.permute.xlu0 %451
      %vm461 = vcmask 130144
      %462 = vst.msk [vmem:[#allocation4] sm:$0xff] %vm461, %v438
      %463 = vst.msk [vmem:[#allocation4 + $0x8] sm:$0xff] %vm461, %v440
      %464 = vst.msk [vmem:[#allocation4 + $0x10] sm:$0xff] %vm461, %v442
      %465 = vst.msk [vmem:[#allocation4 + $0x18] sm:$0xff] %vm461, %v444
      %466 = vst.msk [vmem:[#allocation4 + $0x20] sm:$0xff] %vm461, %v446
      %467 = vst.msk [vmem:[#allocation4 + $0x28] sm:$0xff] %vm461, %v448
      %468 = vst.msk [vmem:[#allocation4 + $0x30] sm:$0xff] %vm461, %v450
      %469 = vst.msk [vmem:[#allocation4 + $0x38] sm:$0xff] %vm461, %v452
      %v470 = vld [vmem:[%s298 + $0x1] sm:$0xff]
      %v471 = vld [vmem:[%s298 + $0x11] sm:$0xff]
      %v472 = vld [vmem:[%s298 + $0x21] sm:$0xff]
      %v473 = vld [vmem:[%s298 + $0x31] sm:$0xff]
      %v474 = vld [vmem:[%s298 + $0x41] sm:$0xff]
      %v475 = vld [vmem:[%s298 + $0x51] sm:$0xff]
      %v476 = vld [vmem:[%s298 + $0x61] sm:$0xff]
      %v477 = vld [vmem:[%s298 + $0x71] sm:$0xff]
      %486 = vrot.lane.b32.xlu0 %v470, 16
      %v487 = vpop.permute.xlu0 %486
      %488 = vrot.lane.b32.xlu0 %v471, 16
      %v489 = vpop.permute.xlu0 %488
      %490 = vrot.lane.b32.xlu0 %v472, 16
      %v491 = vpop.permute.xlu0 %490
      %492 = vrot.lane.b32.xlu0 %v473, 16
      %v493 = vpop.permute.xlu0 %492
      %494 = vrot.lane.b32.xlu0 %v474, 16
      %v495 = vpop.permute.xlu0 %494
      %496 = vrot.lane.b32.xlu0 %v475, 16
      %v497 = vpop.permute.xlu0 %496
      %498 = vrot.lane.b32.xlu0 %v476, 16
      %v499 = vpop.permute.xlu0 %498
      %500 = vrot.lane.b32.xlu0 %v477, 16
      %v501 = vpop.permute.xlu0 %500
      %vm510 = vcmask 162944
      %511 = vst.msk [vmem:[#allocation4] sm:$0xff] %vm510, %v487
      %512 = vst.msk [vmem:[#allocation4 + $0x8] sm:$0xff] %vm510, %v489
      %513 = vst.msk [vmem:[#allocation4 + $0x10] sm:$0xff] %vm510, %v491
      %514 = vst.msk [vmem:[#allocation4 + $0x18] sm:$0xff] %vm510, %v493
      %515 = vst.msk [vmem:[#allocation4 + $0x20] sm:$0xff] %vm510, %v495
      %516 = vst.msk [vmem:[#allocation4 + $0x28] sm:$0xff] %vm510, %v497
      %517 = vst.msk [vmem:[#allocation4 + $0x30] sm:$0xff] %vm510, %v499
      %518 = vst.msk [vmem:[#allocation4 + $0x38] sm:$0xff] %vm510, %v501
      %v519 = vld [vmem:[%s298 + $0x2] sm:$0xff]
      %v520 = vld [vmem:[%s298 + $0x12] sm:$0xff]
      %v521 = vld [vmem:[%s298 + $0x22] sm:$0xff]
      %v522 = vld [vmem:[%s298 + $0x32] sm:$0xff]
      %v523 = vld [vmem:[%s298 + $0x42] sm:$0xff]
      %v524 = vld [vmem:[%s298 + $0x52] sm:$0xff]
      %v525 = vld [vmem:[%s298 + $0x62] sm:$0xff]
      %v526 = vld [vmem:[%s298 + $0x72] sm:$0xff]
      %535 = vrot.lane.b32.xlu0 %v519, 20
      %v536 = vpop.permute.xlu0 %535
      %537 = vrot.lane.b32.xlu0 %v520, 20
      %v538 = vpop.permute.xlu0 %537
      %539 = vrot.lane.b32.xlu0 %v521, 20
      %v540 = vpop.permute.xlu0 %539
      %541 = vrot.lane.b32.xlu0 %v522, 20
      %v542 = vpop.permute.xlu0 %541
      %543 = vrot.lane.b32.xlu0 %v523, 20
      %v544 = vpop.permute.xlu0 %543
      %545 = vrot.lane.b32.xlu0 %v524, 20
      %v546 = vpop.permute.xlu0 %545
      %547 = vrot.lane.b32.xlu0 %v525, 20
      %v548 = vpop.permute.xlu0 %547
      %549 = vrot.lane.b32.xlu0 %v526, 20
      %v550 = vpop.permute.xlu0 %549
      %vm559 = vcmask 195744
      %560 = vst.msk [vmem:[#allocation4] sm:$0xff] %vm559, %v536
      %561 = vst.msk [vmem:[#allocation4 + $0x8] sm:$0xff] %vm559, %v538
      %562 = vst.msk [vmem:[#allocation4 + $0x10] sm:$0xff] %vm559, %v540
      %563 = vst.msk [vmem:[#allocation4 + $0x18] sm:$0xff] %vm559, %v542
      %564 = vst.msk [vmem:[#allocation4 + $0x20] sm:$0xff] %vm559, %v544
      %565 = vst.msk [vmem:[#allocation4 + $0x28] sm:$0xff] %vm559, %v546
      %566 = vst.msk [vmem:[#allocation4 + $0x30] sm:$0xff] %vm559, %v548
      %567 = vst.msk [vmem:[#allocation4 + $0x38] sm:$0xff] %vm559, %v550
      %s568 = scalar_lea.vmem [#allocation2], 32
      %v569 = vld [vmem:[%s568] sm:$0xff]
      %v570 = vld [vmem:[%s568 + $0x10] sm:$0xff]
      %v571 = vld [vmem:[%s568 + $0x20] sm:$0xff]
      %v572 = vld [vmem:[%s568 + $0x30] sm:$0xff]
      %v573 = vld [vmem:[%s568 + $0x40] sm:$0xff]
      %v574 = vld [vmem:[%s568 + $0x50] sm:$0xff]
      %v575 = vld [vmem:[%s568 + $0x60] sm:$0xff]
      %v576 = vld [vmem:[%s568 + $0x70] sm:$0xff]
      %585 = vrot.lane.b32.xlu0 %v569, 24
      %v586 = vpop.permute.xlu0 %585
      %587 = vrot.lane.b32.xlu0 %v570, 24
      %v588 = vpop.permute.xlu0 %587
      %589 = vrot.lane.b32.xlu0 %v571, 24
      %v590 = vpop.permute.xlu0 %589
      %591 = vrot.lane.b32.xlu0 %v572, 24
      %v592 = vpop.permute.xlu0 %591
      %593 = vrot.lane.b32.xlu0 %v573, 24
      %v594 = vpop.permute.xlu0 %593
      %595 = vrot.lane.b32.xlu0 %v574, 24
      %v596 = vpop.permute.xlu0 %595
      %597 = vrot.lane.b32.xlu0 %v575, 24
      %v598 = vpop.permute.xlu0 %597
      %599 = vrot.lane.b32.xlu0 %v576, 24
      %v600 = vpop.permute.xlu0 %599
      %vm609 = vcmask 228544
      %610 = vst.msk [vmem:[#allocation4] sm:$0xff] %vm609, %v586
      %611 = vst.msk [vmem:[#allocation4 + $0x8] sm:$0xff] %vm609, %v588
      %612 = vst.msk [vmem:[#allocation4 + $0x10] sm:$0xff] %vm609, %v590
      %613 = vst.msk [vmem:[#allocation4 + $0x18] sm:$0xff] %vm609, %v592
      %614 = vst.msk [vmem:[#allocation4 + $0x20] sm:$0xff] %vm609, %v594
      %615 = vst.msk [vmem:[#allocation4 + $0x28] sm:$0xff] %vm609, %v596
      %616 = vst.msk [vmem:[#allocation4 + $0x30] sm:$0xff] %vm609, %v598
      %617 = vst.msk [vmem:[#allocation4 + $0x38] sm:$0xff] %vm609, %v600
      %v618 = vld [vmem:[%s568 + $0x1] sm:$0xff]
      %v619 = vld [vmem:[%s568 + $0x11] sm:$0xff]
      %v620 = vld [vmem:[%s568 + $0x21] sm:$0xff]
      %v621 = vld [vmem:[%s568 + $0x31] sm:$0xff]
      %v622 = vld [vmem:[%s568 + $0x41] sm:$0xff]
      %v623 = vld [vmem:[%s568 + $0x51] sm:$0xff]
      %v624 = vld [vmem:[%s568 + $0x61] sm:$0xff]
      %v625 = vld [vmem:[%s568 + $0x71] sm:$0xff]
      %634 = vrot.lane.b32.xlu0 %v618, 28
      %v635 = vpop.permute.xlu0 %634
      %636 = vrot.lane.b32.xlu0 %v619, 28
      %v637 = vpop.permute.xlu0 %636
      %638 = vrot.lane.b32.xlu0 %v620, 28
      %v639 = vpop.permute.xlu0 %638
      %640 = vrot.lane.b32.xlu0 %v621, 28
      %v641 = vpop.permute.xlu0 %640
      %642 = vrot.lane.b32.xlu0 %v622, 28
      %v643 = vpop.permute.xlu0 %642
      %644 = vrot.lane.b32.xlu0 %v623, 28
      %v645 = vpop.permute.xlu0 %644
      %646 = vrot.lane.b32.xlu0 %v624, 28
      %v647 = vpop.permute.xlu0 %646
      %648 = vrot.lane.b32.xlu0 %v625, 28
      %v649 = vpop.permute.xlu0 %648
      %vm658 = vcmask 261344
      %659 = vst.msk [vmem:[#allocation4] sm:$0xff] %vm658, %v635
      %660 = vst.msk [vmem:[#allocation4 + $0x8] sm:$0xff] %vm658, %v637
      %661 = vst.msk [vmem:[#allocation4 + $0x10] sm:$0xff] %vm658, %v639
      %662 = vst.msk [vmem:[#allocation4 + $0x18] sm:$0xff] %vm658, %v641
      %663 = vst.msk [vmem:[#allocation4 + $0x20] sm:$0xff] %vm658, %v643
      %664 = vst.msk [vmem:[#allocation4 + $0x28] sm:$0xff] %vm658, %v645
      %665 = vst.msk [vmem:[#allocation4 + $0x30] sm:$0xff] %vm658, %v647
      %666 = vst.msk [vmem:[#allocation4 + $0x38] sm:$0xff] %vm658, %v649
      %v667 = vld [vmem:[%s568 + $0x2] sm:$0xff]
      %v668 = vld [vmem:[%s568 + $0x12] sm:$0xff]
      %v669 = vld [vmem:[%s568 + $0x22] sm:$0xff]
      %v670 = vld [vmem:[%s568 + $0x32] sm:$0xff]
      %v671 = vld [vmem:[%s568 + $0x42] sm:$0xff]
      %v672 = vld [vmem:[%s568 + $0x52] sm:$0xff]
      %v673 = vld [vmem:[%s568 + $0x62] sm:$0xff]
      %v674 = vld [vmem:[%s568 + $0x72] sm:$0xff]
      %683 = vrot.lane.b32.xlu0 %v667, 32
      %v684 = vpop.permute.xlu0 %683
      %685 = vrot.lane.b32.xlu0 %v668, 32
      %v686 = vpop.permute.xlu0 %685
      %687 = vrot.lane.b32.xlu0 %v669, 32
      %v688 = vpop.permute.xlu0 %687
      %689 = vrot.lane.b32.xlu0 %v670, 32
      %v690 = vpop.permute.xlu0 %689
      %691 = vrot.lane.b32.xlu0 %v671, 32
      %v692 = vpop.permute.xlu0 %691
      %693 = vrot.lane.b32.xlu0 %v672, 32
      %v694 = vpop.permute.xlu0 %693
      %695 = vrot.lane.b32.xlu0 %v673, 32
      %v696 = vpop.permute.xlu0 %695
      %697 = vrot.lane.b32.xlu0 %v674, 32
      %v698 = vpop.permute.xlu0 %697
      %vm707 = vcmask 294144
      %708 = vst.msk [vmem:[#allocation4] sm:$0xff] %vm707, %v684
      %709 = vst.msk [vmem:[#allocation4 + $0x8] sm:$0xff] %vm707, %v686
      %710 = vst.msk [vmem:[#allocation4 + $0x10] sm:$0xff] %vm707, %v688
      %711 = vst.msk [vmem:[#allocation4 + $0x18] sm:$0xff] %vm707, %v690
      %712 = vst.msk [vmem:[#allocation4 + $0x20] sm:$0xff] %vm707, %v692
      %713 = vst.msk [vmem:[#allocation4 + $0x28] sm:$0xff] %vm707, %v694
      %714 = vst.msk [vmem:[#allocation4 + $0x30] sm:$0xff] %vm707, %v696
      %715 = vst.msk [vmem:[#allocation4 + $0x38] sm:$0xff] %vm707, %v698
      %v716 = vld [vmem:[#allocation4] sm:$0xff]
      %v717 = vld [vmem:[#allocation4 + $0x8] sm:$0xff]
      %v718 = vld [vmem:[#allocation4 + $0x10] sm:$0xff]
      %v719 = vld [vmem:[#allocation4 + $0x18] sm:$0xff]
      %v720 = vld [vmem:[#allocation4 + $0x20] sm:$0xff]
      %v721 = vld [vmem:[#allocation4 + $0x28] sm:$0xff]
      %v722 = vld [vmem:[#allocation4 + $0x30] sm:$0xff]
      %v723 = vld [vmem:[#allocation4 + $0x38] sm:$0xff]
      %v724 = vpack.c.bf16 %v717, %v716
      %v725 = vpack.c.bf16 %v719, %v718
      %v726 = vpack.c.bf16 %v721, %v720
      %v727 = vpack.c.bf16 %v723, %v722
      %v728 = vld [vmem:[%s1] sm:$0xf]
      %v729 = vld [vmem:[%s1 + $0x4] sm:$0xf]
      %v730 = vld [vmem:[%s1 + $0x8] sm:$0xf]
      %v731 = vld [vmem:[%s1 + $0xc] sm:$0xf]
      %v732 = vld [vmem:[%s1 + $0x10] sm:$0x3]
      %v733 = vld [vmem:[%s2] sm:$0x1]
      %v735 = vlaneseq
      %v736 = vshrl.u32 %v735, 7
      %v737 = vsub.s32 0, %v736
      %v738 = vrot.slane %v733, %v737
      %v745 = vunpack.c.l.b16 %v728
      %v746 = vunpack.c.l.b16 %v729
      %v747 = vunpack.c.l.b16 %v730
      %v748 = vunpack.c.l.b16 %v731
      %v749 = vunpack.c.l.b16 %v732
      %v750 = vpack.c.b16 %v746, %v745
      %v751 = vpack.c.b16 %v748, %v747
      %v752 = vpack.c.b16 %v749, %v749
      %vm755 = vcmask 293888
      %v757 = vsel %vm755, %v724, 0
      %v760 = vsel %vm755, %v725, 0
      %v763 = vsel %vm755, %v726, 0
      %v766 = vsel %vm755, %v727, 0
      %vm768 = vcmask 1041408
      %v770 = vsel %vm768, %v752, 0
      %772 = vmatprep.subr.bf16.mxu0 0
      %773 = vmatpush1.bf16.msra.mxu0 0
      %774 = vmatprep.subr.bf16.mxu0 0
      %775 = vmatpush1.bf16.msra.mxu0 0
      %776 = vmatprep.subr.bf16.mxu0 0
      %777 = vmatpush1.bf16.msra.mxu0 0
      %778 = vmatprep.subr.bf16.mxu0 0
      %779 = vmatpush1.bf16.msra.mxu0 0
      %780 = vmatprep.subr.bf16.mxu0 0
      %781 = vmatpush1.bf16.msra.mxu0 0
      %782 = vmatprep.subr.bf16.mxu0 0
      %783 = vmatpush1.bf16.msra.mxu0 %v770
      %784 = vmatprep.subr.bf16.mxu0 0
      %785 = vmatpush1.bf16.msra.mxu0 %v751
      %786 = vmatprep.subr.bf16.mxu0 0
      %787 = vmatpush1.bf16.msra.mxu0 %v750
      %788 = vmatprep.subr.bf16.mxu0 0
      %789 = vmatpush2.bf16.msra.mxu0 0
      %790 = vmatprep.subr.bf16.mxu0 0
      %791 = vmatpush2.bf16.msra.mxu0 0
      %792 = vmatprep.subr.bf16.mxu0 0
      %793 = vmatpush2.bf16.msra.mxu0 0
      %794 = vmatprep.subr.bf16.mxu0 0
      %795 = vmatpush2.bf16.msra.mxu0 0
      %796 = vmatprep.subr.bf16.mxu0 0
      %797 = vmatpush2.bf16.msra.mxu0 0
      %798 = vmatprep.subr.bf16.mxu0 0
      %799 = vmatpush2.bf16.msra.mxu0 0
      %800 = vmatprep.subr.bf16.mxu0 0
      %801 = vmatpush2.bf16.msra.mxu0 0
      %802 = vmatprep.subr.bf16.mxu0 0
      %803 = vmatpush2.bf16.msra.mxu0 0
      %804 = vmatprep.mubr.bf16.mxu0 0
      %805 = vmatmul.mubr.bf16.gmra.mxu0 %v757
      %v806 = vpop.f32.mrf.mxu0
      %v807 = vadd.f32 %v738, %v806
      %v808 = vpop.f32.mrf.mxu0
      %v809 = vpop.f32.mrf.mxu0
      %v810 = vadd.f32 %v738, %v809
      %v811 = vpop.f32.mrf.mxu0
      %812 = vmatprep.mubr.bf16.mxu0 0
      %813 = vmatmul.mubr.bf16.gmra.mxu0 %v760
      %v814 = vpop.f32.mrf.mxu0
      %v815 = vadd.f32 %v738, %v814
      %v816 = vpop.f32.mrf.mxu0
      %v817 = vpop.f32.mrf.mxu0
      %v818 = vadd.f32 %v738, %v817
      %v819 = vpop.f32.mrf.mxu0
      %820 = vmatprep.mubr.bf16.mxu0 0
      %821 = vmatmul.mubr.bf16.gmra.mxu0 %v763
      %v822 = vpop.f32.mrf.mxu0
      %v823 = vadd.f32 %v738, %v822
      %v824 = vpop.f32.mrf.mxu0
      %v825 = vpop.f32.mrf.mxu0
      %v826 = vadd.f32 %v738, %v825
      %v827 = vpop.f32.mrf.mxu0
      %828 = vmatprep.mubr.bf16.mxu0 0
      %829 = vmatmul.mubr.bf16.gmra.mxu0 %v766
      %v830 = vpop.f32.mrf.mxu0
      %v831 = vadd.f32 %v738, %v830
      %v832 = vpop.f32.mrf.mxu0
      %v833 = vpop.f32.mrf.mxu0
      %v834 = vadd.f32 %v738, %v833
      %v835 = vpop.f32.mrf.mxu0
      %836 = vdwg.mxu0
      %v837 = vmax.f32 %v807, 0.0
      %v838 = vmax.f32 %v810, 0.0
      %v839 = vmax.f32 %v815, 0.0
      %v840 = vmax.f32 %v818, 0.0
      %v841 = vmax.f32 %v823, 0.0
      %v842 = vmax.f32 %v826, 0.0
      %v843 = vmax.f32 %v831, 0.0
      %v844 = vmax.f32 %v834, 0.0
      %s845 = scalar_lea.vmem [#allocation3], 16
      %846 = vst.msk [vmem:[%s845 + $0x1] sm:$0xff] %vm254, %v837
      %847 = vst.msk [vmem:[%s845 + $0x11] sm:$0xff] %vm254, %v838
      %848 = vst.msk [vmem:[%s845 + $0x21] sm:$0xff] %vm254, %v839
      %849 = vst.msk [vmem:[%s845 + $0x31] sm:$0xff] %vm254, %v840
      %850 = vst.msk [vmem:[%s845 + $0x41] sm:$0xff] %vm254, %v841
      %851 = vst.msk [vmem:[%s845 + $0x51] sm:$0xff] %vm254, %v842
      %852 = vst.msk [vmem:[%s845 + $0x61] sm:$0xff] %vm254, %v843
      %853 = vst.msk [vmem:[%s845 + $0x71] sm:$0xff] %vm254, %v844
      %v854 = vld [vmem:[#allocation3] sm:$0xff]
      %v855 = vld [vmem:[#allocation3 + $0x10] sm:$0xff]
      %v856 = vld [vmem:[#allocation3 + $0x20] sm:$0xff]
      %v857 = vld [vmem:[#allocation3 + $0x30] sm:$0xff]
      %v858 = vld [vmem:[#allocation3 + $0x40] sm:$0xff]
      %v859 = vld [vmem:[#allocation3 + $0x50] sm:$0xff]
      %v860 = vld [vmem:[#allocation3 + $0x60] sm:$0xff]
      %v861 = vld [vmem:[#allocation3 + $0x70] sm:$0xff]
      %862 = vst.msk [vmem:[#allocation4] sm:$0xff] %vm254, %v854
      %863 = vst.msk [vmem:[#allocation4 + $0x8] sm:$0xff] %vm254, %v855
      %864 = vst.msk [vmem:[#allocation4 + $0x10] sm:$0xff] %vm254, %v856
      %865 = vst.msk [vmem:[#allocation4 + $0x18] sm:$0xff] %vm254, %v857
      %866 = vst.msk [vmem:[#allocation4 + $0x20] sm:$0xff] %vm254, %v858
      %867 = vst.msk [vmem:[#allocation4 + $0x28] sm:$0xff] %vm254, %v859
      %868 = vst.msk [vmem:[#allocation4 + $0x30] sm:$0xff] %vm254, %v860
      %869 = vst.msk [vmem:[#allocation4 + $0x38] sm:$0xff] %vm254, %v861
      %v870 = vld [vmem:[#allocation3 + $0x1] sm:$0xff]
      %v871 = vld [vmem:[#allocation3 + $0x11] sm:$0xff]
      %v872 = vld [vmem:[#allocation3 + $0x21] sm:$0xff]
      %v873 = vld [vmem:[#allocation3 + $0x31] sm:$0xff]
      %v874 = vld [vmem:[#allocation3 + $0x41] sm:$0xff]
      %v875 = vld [vmem:[#allocation3 + $0x51] sm:$0xff]
      %v876 = vld [vmem:[#allocation3 + $0x61] sm:$0xff]
      %v877 = vld [vmem:[#allocation3 + $0x71] sm:$0xff]
      %886 = vrot.lane.b32.xlu0 %v870, 8
      %v887 = vpop.permute.xlu0 %886
      %888 = vrot.lane.b32.xlu0 %v871, 8
      %v889 = vpop.permute.xlu0 %888
      %890 = vrot.lane.b32.xlu0 %v872, 8
      %v891 = vpop.permute.xlu0 %890
      %892 = vrot.lane.b32.xlu0 %v873, 8
      %v893 = vpop.permute.xlu0 %892
      %894 = vrot.lane.b32.xlu0 %v874, 8
      %v895 = vpop.permute.xlu0 %894
      %896 = vrot.lane.b32.xlu0 %v875, 8
      %v897 = vpop.permute.xlu0 %896
      %898 = vrot.lane.b32.xlu0 %v876, 8
      %v899 = vpop.permute.xlu0 %898
      %900 = vrot.lane.b32.xlu0 %v877, 8
      %v901 = vpop.permute.xlu0 %900
      %vm910 = vcmask 130112
      %911 = vst.msk [vmem:[#allocation4] sm:$0xff] %vm910, %v887
      %912 = vst.msk [vmem:[#allocation4 + $0x8] sm:$0xff] %vm910, %v889
      %913 = vst.msk [vmem:[#allocation4 + $0x10] sm:$0xff] %vm910, %v891
      %914 = vst.msk [vmem:[#allocation4 + $0x18] sm:$0xff] %vm910, %v893
      %915 = vst.msk [vmem:[#allocation4 + $0x20] sm:$0xff] %vm910, %v895
      %916 = vst.msk [vmem:[#allocation4 + $0x28] sm:$0xff] %vm910, %v897
      %917 = vst.msk [vmem:[#allocation4 + $0x30] sm:$0xff] %vm910, %v899
      %918 = vst.msk [vmem:[#allocation4 + $0x38] sm:$0xff] %vm910, %v901
      %v919 = vld [vmem:[#allocation3 + $0x2] sm:$0xff]
      %v920 = vld [vmem:[#allocation3 + $0x12] sm:$0xff]
      %v921 = vld [vmem:[#allocation3 + $0x22] sm:$0xff]
      %v922 = vld [vmem:[#allocation3 + $0x32] sm:$0xff]
      %v923 = vld [vmem:[#allocation3 + $0x42] sm:$0xff]
      %v924 = vld [vmem:[#allocation3 + $0x52] sm:$0xff]
      %v925 = vld [vmem:[#allocation3 + $0x62] sm:$0xff]
      %v926 = vld [vmem:[#allocation3 + $0x72] sm:$0xff]
      %935 = vrot.lane.b32.xlu0 %v919, 16
      %v936 = vpop.permute.xlu0 %935
      %937 = vrot.lane.b32.xlu0 %v920, 16
      %v938 = vpop.permute.xlu0 %937
      %939 = vrot.lane.b32.xlu0 %v921, 16
      %v940 = vpop.permute.xlu0 %939
      %941 = vrot.lane.b32.xlu0 %v922, 16
      %v942 = vpop.permute.xlu0 %941
      %943 = vrot.lane.b32.xlu0 %v923, 16
      %v944 = vpop.permute.xlu0 %943
      %945 = vrot.lane.b32.xlu0 %v924, 16
      %v946 = vpop.permute.xlu0 %945
      %947 = vrot.lane.b32.xlu0 %v925, 16
      %v948 = vpop.permute.xlu0 %947
      %949 = vrot.lane.b32.xlu0 %v926, 16
      %v950 = vpop.permute.xlu0 %949
      %vm959 = vcmask 195712
      %960 = vst.msk [vmem:[#allocation4] sm:$0xff] %vm959, %v936
      %961 = vst.msk [vmem:[#allocation4 + $0x8] sm:$0xff] %vm959, %v938
      %962 = vst.msk [vmem:[#allocation4 + $0x10] sm:$0xff] %vm959, %v940
      %963 = vst.msk [vmem:[#allocation4 + $0x18] sm:$0xff] %vm959, %v942
      %964 = vst.msk [vmem:[#allocation4 + $0x20] sm:$0xff] %vm959, %v944
      %965 = vst.msk [vmem:[#allocation4 + $0x28] sm:$0xff] %vm959, %v946
      %966 = vst.msk [vmem:[#allocation4 + $0x30] sm:$0xff] %vm959, %v948
      %967 = vst.msk [vmem:[#allocation4 + $0x38] sm:$0xff] %vm959, %v950
      %v968 = vld [vmem:[%s845] sm:$0xff]
      %v969 = vld [vmem:[%s845 + $0x10] sm:$0xff]
      %v970 = vld [vmem:[%s845 + $0x20] sm:$0xff]
      %v971 = vld [vmem:[%s845 + $0x30] sm:$0xff]
      %v972 = vld [vmem:[%s845 + $0x40] sm:$0xff]
      %v973 = vld [vmem:[%s845 + $0x50] sm:$0xff]
      %v974 = vld [vmem:[%s845 + $0x60] sm:$0xff]
      %v975 = vld [vmem:[%s845 + $0x70] sm:$0xff]
      %984 = vrot.lane.b32.xlu0 %v968, 24
      %v985 = vpop.permute.xlu0 %984
      %986 = vrot.lane.b32.xlu0 %v969, 24
      %v987 = vpop.permute.xlu0 %986
      %988 = vrot.lane.b32.xlu0 %v970, 24
      %v989 = vpop.permute.xlu0 %988
      %990 = vrot.lane.b32.xlu0 %v971, 24
      %v991 = vpop.permute.xlu0 %990
      %992 = vrot.lane.b32.xlu0 %v972, 24
      %v993 = vpop.permute.xlu0 %992
      %994 = vrot.lane.b32.xlu0 %v973, 24
      %v995 = vpop.permute.xlu0 %994
      %996 = vrot.lane.b32.xlu0 %v974, 24
      %v997 = vpop.permute.xlu0 %996
      %998 = vrot.lane.b32.xlu0 %v975, 24
      %v999 = vpop.permute.xlu0 %998
      %vm1008 = vcmask 261312
      %1009 = vst.msk [vmem:[#allocation4] sm:$0xff] %vm1008, %v985
      %1010 = vst.msk [vmem:[#allocation4 + $0x8] sm:$0xff] %vm1008, %v987
      %1011 = vst.msk [vmem:[#allocation4 + $0x10] sm:$0xff] %vm1008, %v989
      %1012 = vst.msk [vmem:[#allocation4 + $0x18] sm:$0xff] %vm1008, %v991
      %1013 = vst.msk [vmem:[#allocation4 + $0x20] sm:$0xff] %vm1008, %v993
      %1014 = vst.msk [vmem:[#allocation4 + $0x28] sm:$0xff] %vm1008, %v995
      %1015 = vst.msk [vmem:[#allocation4 + $0x30] sm:$0xff] %vm1008, %v997
      %1016 = vst.msk [vmem:[#allocation4 + $0x38] sm:$0xff] %vm1008, %v999
      %v1017 = vld [vmem:[%s845 + $0x1] sm:$0xff]
      %v1018 = vld [vmem:[%s845 + $0x11] sm:$0xff]
      %v1019 = vld [vmem:[%s845 + $0x21] sm:$0xff]
      %v1020 = vld [vmem:[%s845 + $0x31] sm:$0xff]
      %v1021 = vld [vmem:[%s845 + $0x41] sm:$0xff]
      %v1022 = vld [vmem:[%s845 + $0x51] sm:$0xff]
      %v1023 = vld [vmem:[%s845 + $0x61] sm:$0xff]
      %v1024 = vld [vmem:[%s845 + $0x71] sm:$0xff]
      %1033 = vrot.lane.b32.xlu0 %v1017, 32
      %v1034 = vpop.permute.xlu0 %1033
      %1035 = vrot.lane.b32.xlu0 %v1018, 32
      %v1036 = vpop.permute.xlu0 %1035
      %1037 = vrot.lane.b32.xlu0 %v1019, 32
      %v1038 = vpop.permute.xlu0 %1037
      %1039 = vrot.lane.b32.xlu0 %v1020, 32
      %v1040 = vpop.permute.xlu0 %1039
      %1041 = vrot.lane.b32.xlu0 %v1021, 32
      %v1042 = vpop.permute.xlu0 %1041
      %1043 = vrot.lane.b32.xlu0 %v1022, 32
      %v1044 = vpop.permute.xlu0 %1043
      %1045 = vrot.lane.b32.xlu0 %v1023, 32
      %v1046 = vpop.permute.xlu0 %1045
      %1047 = vrot.lane.b32.xlu0 %v1024, 32
      %v1048 = vpop.permute.xlu0 %1047
      %vm1057 = vcmask 326912
      %1058 = vst.msk [vmem:[#allocation4] sm:$0xff] %vm1057, %v1034
      %1059 = vst.msk [vmem:[#allocation4 + $0x8] sm:$0xff] %vm1057, %v1036
      %1060 = vst.msk [vmem:[#allocation4 + $0x10] sm:$0xff] %vm1057, %v1038
      %1061 = vst.msk [vmem:[#allocation4 + $0x18] sm:$0xff] %vm1057, %v1040
      %1062 = vst.msk [vmem:[#allocation4 + $0x20] sm:$0xff] %vm1057, %v1042
      %1063 = vst.msk [vmem:[#allocation4 + $0x28] sm:$0xff] %vm1057, %v1044
      %1064 = vst.msk [vmem:[#allocation4 + $0x30] sm:$0xff] %vm1057, %v1046
      %1065 = vst.msk [vmem:[#allocation4 + $0x38] sm:$0xff] %vm1057, %v1048
      %v1066 = vld [vmem:[%s845 + $0x2] sm:$0xff]
      %v1067 = vld [vmem:[%s845 + $0x12] sm:$0xff]
      %v1068 = vld [vmem:[%s845 + $0x22] sm:$0xff]
      %v1069 = vld [vmem:[%s845 + $0x32] sm:$0xff]
      %v1070 = vld [vmem:[%s845 + $0x42] sm:$0xff]
      %v1071 = vld [vmem:[%s845 + $0x52] sm:$0xff]
      %v1072 = vld [vmem:[%s845 + $0x62] sm:$0xff]
      %v1073 = vld [vmem:[%s845 + $0x72] sm:$0xff]
      %1082 = vrot.lane.b32.xlu0 %v1066, 40
      %v1083 = vpop.permute.xlu0 %1082
      %1084 = vrot.lane.b32.xlu0 %v1067, 40
      %v1085 = vpop.permute.xlu0 %1084
      %1086 = vrot.lane.b32.xlu0 %v1068, 40
      %v1087 = vpop.permute.xlu0 %1086
      %1088 = vrot.lane.b32.xlu0 %v1069, 40
      %v1089 = vpop.permute.xlu0 %1088
      %1090 = vrot.lane.b32.xlu0 %v1070, 40
      %v1091 = vpop.permute.xlu0 %1090
      %1092 = vrot.lane.b32.xlu0 %v1071, 40
      %v1093 = vpop.permute.xlu0 %1092
      %1094 = vrot.lane.b32.xlu0 %v1072, 40
      %v1095 = vpop.permute.xlu0 %1094
      %1096 = vrot.lane.b32.xlu0 %v1073, 40
      %v1097 = vpop.permute.xlu0 %1096
      %vm1106 = vcmask 392512
      %1107 = vst.msk [vmem:[#allocation4] sm:$0xff] %vm1106, %v1083
      %1108 = vst.msk [vmem:[#allocation4 + $0x8] sm:$0xff] %vm1106, %v1085
      %1109 = vst.msk [vmem:[#allocation4 + $0x10] sm:$0xff] %vm1106, %v1087
      %1110 = vst.msk [vmem:[#allocation4 + $0x18] sm:$0xff] %vm1106, %v1089
      %1111 = vst.msk [vmem:[#allocation4 + $0x20] sm:$0xff] %vm1106, %v1091
      %1112 = vst.msk [vmem:[#allocation4 + $0x28] sm:$0xff] %vm1106, %v1093
      %1113 = vst.msk [vmem:[#allocation4 + $0x30] sm:$0xff] %vm1106, %v1095
      %1114 = vst.msk [vmem:[#allocation4 + $0x38] sm:$0xff] %vm1106, %v1097
      %s1115 = scalar_lea.vmem [#allocation3], 32
      %v1116 = vld [vmem:[%s1115] sm:$0xff]
      %v1117 = vld [vmem:[%s1115 + $0x10] sm:$0xff]
      %v1118 = vld [vmem:[%s1115 + $0x20] sm:$0xff]
      %v1119 = vld [vmem:[%s1115 + $0x30] sm:$0xff]
      %v1120 = vld [vmem:[%s1115 + $0x40] sm:$0xff]
      %v1121 = vld [vmem:[%s1115 + $0x50] sm:$0xff]
      %v1122 = vld [vmem:[%s1115 + $0x60] sm:$0xff]
      %v1123 = vld [vmem:[%s1115 + $0x70] sm:$0xff]
      %1132 = vrot.lane.b32.xlu0 %v1116, 48
      %v1133 = vpop.permute.xlu0 %1132
      %1134 = vrot.lane.b32.xlu0 %v1117, 48
      %v1135 = vpop.permute.xlu0 %1134
      %1136 = vrot.lane.b32.xlu0 %v1118, 48
      %v1137 = vpop.permute.xlu0 %1136
      %1138 = vrot.lane.b32.xlu0 %v1119, 48
      %v1139 = vpop.permute.xlu0 %1138
      %1140 = vrot.lane.b32.xlu0 %v1120, 48
      %v1141 = vpop.permute.xlu0 %1140
      %1142 = vrot.lane.b32.xlu0 %v1121, 48
      %v1143 = vpop.permute.xlu0 %1142
      %1144 = vrot.lane.b32.xlu0 %v1122, 48
      %v1145 = vpop.permute.xlu0 %1144
      %1146 = vrot.lane.b32.xlu0 %v1123, 48
      %v1147 = vpop.permute.xlu0 %1146
      %vm1156 = vcmask 458112
      %1157 = vst.msk [vmem:[#allocation4] sm:$0xff] %vm1156, %v1133
      %1158 = vst.msk [vmem:[#allocation4 + $0x8] sm:$0xff] %vm1156, %v1135
      %1159 = vst.msk [vmem:[#allocation4 + $0x10] sm:$0xff] %vm1156, %v1137
      %1160 = vst.msk [vmem:[#allocation4 + $0x18] sm:$0xff] %vm1156, %v1139
      %1161 = vst.msk [vmem:[#allocation4 + $0x20] sm:$0xff] %vm1156, %v1141
      %1162 = vst.msk [vmem:[#allocation4 + $0x28] sm:$0xff] %vm1156, %v1143
      %1163 = vst.msk [vmem:[#allocation4 + $0x30] sm:$0xff] %vm1156, %v1145
      %1164 = vst.msk [vmem:[#allocation4 + $0x38] sm:$0xff] %vm1156, %v1147
      %v1165 = vld [vmem:[%s1115 + $0x1] sm:$0xff]
      %v1166 = vld [vmem:[%s1115 + $0x11] sm:$0xff]
      %v1167 = vld [vmem:[%s1115 + $0x21] sm:$0xff]
      %v1168 = vld [vmem:[%s1115 + $0x31] sm:$0xff]
      %v1169 = vld [vmem:[%s1115 + $0x41] sm:$0xff]
      %v1170 = vld [vmem:[%s1115 + $0x51] sm:$0xff]
      %v1171 = vld [vmem:[%s1115 + $0x61] sm:$0xff]
      %v1172 = vld [vmem:[%s1115 + $0x71] sm:$0xff]
      %1181 = vrot.lane.b32.xlu0 %v1165, 56
      %v1182 = vpop.permute.xlu0 %1181
      %1183 = vrot.lane.b32.xlu0 %v1166, 56
      %v1184 = vpop.permute.xlu0 %1183
      %1185 = vrot.lane.b32.xlu0 %v1167, 56
      %v1186 = vpop.permute.xlu0 %1185
      %1187 = vrot.lane.b32.xlu0 %v1168, 56
      %v1188 = vpop.permute.xlu0 %1187
      %1189 = vrot.lane.b32.xlu0 %v1169, 56
      %v1190 = vpop.permute.xlu0 %1189
      %1191 = vrot.lane.b32.xlu0 %v1170, 56
      %v1192 = vpop.permute.xlu0 %1191
      %1193 = vrot.lane.b32.xlu0 %v1171, 56
      %v1194 = vpop.permute.xlu0 %1193
      %1195 = vrot.lane.b32.xlu0 %v1172, 56
      %v1196 = vpop.permute.xlu0 %1195
      %vm1205 = vcmask 523712
      %1206 = vst.msk [vmem:[#allocation4] sm:$0xff] %vm1205, %v1182
      %1207 = vst.msk [vmem:[#allocation4 + $0x8] sm:$0xff] %vm1205, %v1184
      %1208 = vst.msk [vmem:[#allocation4 + $0x10] sm:$0xff] %vm1205, %v1186
      %1209 = vst.msk [vmem:[#allocation4 + $0x18] sm:$0xff] %vm1205, %v1188
      %1210 = vst.msk [vmem:[#allocation4 + $0x20] sm:$0xff] %vm1205, %v1190
      %1211 = vst.msk [vmem:[#allocation4 + $0x28] sm:$0xff] %vm1205, %v1192
      %1212 = vst.msk [vmem:[#allocation4 + $0x30] sm:$0xff] %vm1205, %v1194
      %1213 = vst.msk [vmem:[#allocation4 + $0x38] sm:$0xff] %vm1205, %v1196
      %v1214 = vld [vmem:[%s1115 + $0x2] sm:$0xff]
      %v1215 = vld [vmem:[%s1115 + $0x12] sm:$0xff]
      %v1216 = vld [vmem:[%s1115 + $0x22] sm:$0xff]
      %v1217 = vld [vmem:[%s1115 + $0x32] sm:$0xff]
      %v1218 = vld [vmem:[%s1115 + $0x42] sm:$0xff]
      %v1219 = vld [vmem:[%s1115 + $0x52] sm:$0xff]
      %v1220 = vld [vmem:[%s1115 + $0x62] sm:$0xff]
      %v1221 = vld [vmem:[%s1115 + $0x72] sm:$0xff]
      %1230 = vrot.lane.b32.xlu0 %v1214, 64
      %v1231 = vpop.permute.xlu0 %1230
      %1232 = vrot.lane.b32.xlu0 %v1215, 64
      %v1233 = vpop.permute.xlu0 %1232
      %1234 = vrot.lane.b32.xlu0 %v1216, 64
      %v1235 = vpop.permute.xlu0 %1234
      %1236 = vrot.lane.b32.xlu0 %v1217, 64
      %v1237 = vpop.permute.xlu0 %1236
      %1238 = vrot.lane.b32.xlu0 %v1218, 64
      %v1239 = vpop.permute.xlu0 %1238
      %1240 = vrot.lane.b32.xlu0 %v1219, 64
      %v1241 = vpop.permute.xlu0 %1240
      %1242 = vrot.lane.b32.xlu0 %v1220, 64
      %v1243 = vpop.permute.xlu0 %1242
      %1244 = vrot.lane.b32.xlu0 %v1221, 64
      %v1245 = vpop.permute.xlu0 %1244
      %vm1254 = vcmask 589312
      %1255 = vst.msk [vmem:[#allocation4] sm:$0xff] %vm1254, %v1231
      %1256 = vst.msk [vmem:[#allocation4 + $0x8] sm:$0xff] %vm1254, %v1233
      %1257 = vst.msk [vmem:[#allocation4 + $0x10] sm:$0xff] %vm1254, %v1235
      %1258 = vst.msk [vmem:[#allocation4 + $0x18] sm:$0xff] %vm1254, %v1237
      %1259 = vst.msk [vmem:[#allocation4 + $0x20] sm:$0xff] %vm1254, %v1239
      %1260 = vst.msk [vmem:[#allocation4 + $0x28] sm:$0xff] %vm1254, %v1241
      %1261 = vst.msk [vmem:[#allocation4 + $0x30] sm:$0xff] %vm1254, %v1243
      %1262 = vst.msk [vmem:[#allocation4 + $0x38] sm:$0xff] %vm1254, %v1245
      %v1263 = vld [vmem:[#allocation4] sm:$0xff]
      %v1264 = vld [vmem:[#allocation4 + $0x8] sm:$0xff]
      %v1265 = vld [vmem:[#allocation4 + $0x10] sm:$0xff]
      %v1266 = vld [vmem:[#allocation4 + $0x18] sm:$0xff]
      %v1267 = vld [vmem:[#allocation4 + $0x20] sm:$0xff]
      %v1268 = vld [vmem:[#allocation4 + $0x28] sm:$0xff]
      %v1269 = vld [vmem:[#allocation4 + $0x30] sm:$0xff]
      %v1270 = vld [vmem:[#allocation4 + $0x38] sm:$0xff]
      %v1271 = vpack.c.bf16 %v1264, %v1263
      %v1272 = vpack.c.bf16 %v1266, %v1265
      %v1273 = vpack.c.bf16 %v1268, %v1267
      %v1274 = vpack.c.bf16 %v1270, %v1269
      %v1275 = vld [vmem:[%s3] sm:$0xf]
      %v1276 = vld [vmem:[%s3 + $0x4] sm:$0xf]
      %v1277 = vld [vmem:[%s3 + $0x8] sm:$0xf]
      %v1278 = vld [vmem:[%s3 + $0xc] sm:$0xf]
      %v1279 = vld [vmem:[%s3 + $0x10] sm:$0xf]
      %v1280 = vld [vmem:[%s3 + $0x14] sm:$0xf]
      %v1281 = vld [vmem:[%s3 + $0x18] sm:$0xf]
      %v1282 = vld [vmem:[%s3 + $0x1c] sm:$0xf]
      %v1283 = vld [vmem:[%s3 + $0x20] sm:$0xf]
      %v1284 = vld [vmem:[%s4] sm:$0x1]
      %v1286 = vlaneseq
      %v1287 = vshrl.u32 %v1286, 7
      %v1288 = vsub.s32 0, %v1287
      %v1289 = vrot.slane %v1284, %v1288
      %v1300 = vunpack.c.l.b16 %v1275
      %v1301 = vunpack.c.l.b16 %v1276
      %v1302 = vunpack.c.l.b16 %v1277
      %v1303 = vunpack.c.l.b16 %v1278
      %v1304 = vunpack.c.l.b16 %v1279
      %v1305 = vunpack.c.l.b16 %v1280
      %v1306 = vunpack.c.l.b16 %v1281
      %v1307 = vunpack.c.l.b16 %v1282
      %v1308 = vunpack.c.l.b16 %v1283
      %v1309 = vpack.c.b16 %v1301, %v1300
      %v1310 = vpack.c.b16 %v1303, %v1302
      %v1311 = vpack.c.b16 %v1305, %v1304
      %v1312 = vpack.c.b16 %v1307, %v1306
      %v1313 = vpack.c.b16 %v1308, %v1308
      %vm1318 = vcmask 588800
      %v1320 = vsel %vm1318, %v1271, 0
      %v1323 = vsel %vm1318, %v1272, 0
      %v1326 = vsel %vm1318, %v1273, 0
      %v1329 = vsel %vm1318, %v1274, 0
      %vm1331 = vcmask 1043456
      %v1333 = vsel %vm1331, %v1313, 0
      %1335 = vmatprep.subr.bf16.mxu0 0
      %1336 = vmatpush1.bf16.msra.mxu0 0
      %1337 = vmatprep.subr.bf16.mxu0 0
      %1338 = vmatpush1.bf16.msra.mxu0 0
      %1339 = vmatprep.subr.bf16.mxu0 0
      %1340 = vmatpush1.bf16.msra.mxu0 0
      %1341 = vmatprep.subr.bf16.mxu0 0
      %1342 = vmatpush1.bf16.msra.mxu0 %v1333
      %1343 = vmatprep.subr.bf16.mxu0 0
      %1344 = vmatpush1.bf16.msra.mxu0 %v1312
      %1345 = vmatprep.subr.bf16.mxu0 0
      %1346 = vmatpush1.bf16.msra.mxu0 %v1311
      %1347 = vmatprep.subr.bf16.mxu0 0
      %1348 = vmatpush1.bf16.msra.mxu0 %v1310
      %1349 = vmatprep.subr.bf16.mxu0 0
      %1350 = vmatpush1.bf16.msra.mxu0 %v1309
      %1351 = vmatprep.subr.bf16.mxu0 0
      %1352 = vmatpush2.bf16.msra.mxu0 0
      %1353 = vmatprep.subr.bf16.mxu0 0
      %1354 = vmatpush2.bf16.msra.mxu0 0
      %1355 = vmatprep.subr.bf16.mxu0 0
      %1356 = vmatpush2.bf16.msra.mxu0 0
      %1357 = vmatprep.subr.bf16.mxu0 0
      %1358 = vmatpush2.bf16.msra.mxu0 0
      %1359 = vmatprep.subr.bf16.mxu0 0
      %1360 = vmatpush2.bf16.msra.mxu0 0
      %1361 = vmatprep.subr.bf16.mxu0 0
      %1362 = vmatpush2.bf16.msra.mxu0 0
      %1363 = vmatprep.subr.bf16.mxu0 0
      %1364 = vmatpush2.bf16.msra.mxu0 0
      %1365 = vmatprep.subr.bf16.mxu0 0
      %1366 = vmatpush2.bf16.msra.mxu0 0
      %1367 = vmatprep.mubr.bf16.mxu0 0
      %1368 = vmatmul.mubr.bf16.gmra.mxu0 %v1320
      %v1369 = vpop.f32.mrf.mxu0
      %v1370 = vadd.f32 %v1289, %v1369
      %v1371 = vpop.f32.mrf.mxu0
      %v1372 = vpop.f32.mrf.mxu0
      %v1373 = vadd.f32 %v1289, %v1372
      %v1374 = vpop.f32.mrf.mxu0
      %1375 = vmatprep.mubr.bf16.mxu0 0
      %1376 = vmatmul.mubr.bf16.gmra.mxu0 %v1323
      %v1377 = vpop.f32.mrf.mxu0
      %v1378 = vadd.f32 %v1289, %v1377
      %v1379 = vpop.f32.mrf.mxu0
      %v1380 = vpop.f32.mrf.mxu0
      %v1381 = vadd.f32 %v1289, %v1380
      %v1382 = vpop.f32.mrf.mxu0
      %1383 = vmatprep.mubr.bf16.mxu0 0
      %1384 = vmatmul.mubr.bf16.gmra.mxu0 %v1326
      %v1385 = vpop.f32.mrf.mxu0
      %v1386 = vadd.f32 %v1289, %v1385
      %v1387 = vpop.f32.mrf.mxu0
      %v1388 = vpop.f32.mrf.mxu0
      %v1389 = vadd.f32 %v1289, %v1388
      %v1390 = vpop.f32.mrf.mxu0
      %1391 = vmatprep.mubr.bf16.mxu0 0
      %1392 = vmatmul.mubr.bf16.gmra.mxu0 %v1329
      %v1393 = vpop.f32.mrf.mxu0
      %v1394 = vadd.f32 %v1289, %v1393
      %v1395 = vpop.f32.mrf.mxu0
      %v1396 = vpop.f32.mrf.mxu0
      %v1397 = vadd.f32 %v1289, %v1396
      %v1398 = vpop.f32.mrf.mxu0
      %1399 = vdwg.mxu0
      %v1400 = vmax.f32 %v1370, 0.0
      %v1401 = vmax.f32 %v1373, 0.0
      %v1402 = vmax.f32 %v1378, 0.0
      %v1403 = vmax.f32 %v1381, 0.0
      %v1404 = vmax.f32 %v1386, 0.0
      %v1405 = vmax.f32 %v1389, 0.0
      %v1406 = vmax.f32 %v1394, 0.0
      %v1407 = vmax.f32 %v1397, 0.0
      %1408 = vst.msk [vmem:[%s224] sm:$0xff] %vm254, %v1400
      %1409 = vst.msk [vmem:[%s224 + $0x8] sm:$0xff] %vm254, %v1401
      %1410 = vst.msk [vmem:[%s224 + $0x10] sm:$0xff] %vm254, %v1402
      %1411 = vst.msk [vmem:[%s224 + $0x18] sm:$0xff] %vm254, %v1403
      %1412 = vst.msk [vmem:[%s224 + $0x20] sm:$0xff] %vm254, %v1404
      %1413 = vst.msk [vmem:[%s224 + $0x28] sm:$0xff] %vm254, %v1405
      %1414 = vst.msk [vmem:[%s224 + $0x30] sm:$0xff] %vm254, %v1406
      %1415 = vst.msk [vmem:[%s224 + $0x38] sm:$0xff] %vm254, %v1407
      %p1416 = scmp.lt.s32.totalorder %s16, 1
      %s1417 = scalar_select %p1416, %s16, 1
      %s1418 = smul.addr %s1417, 8
      %s1419 = smul.addr %s1418, 8
      %s1420 = scalar_lea.vmem %s5, %s1419
      // Predicated region
      $region41: #{tpu_custom_call.1} parent=39 // pred_check
        %p1421 = pneg %p144
      $region42: #{tpu_custom_call.1} parent=39 // pred_check_branch
        %1423 = sbr.rel (%p1421) target = $region44
      $region43: #{tpu_custom_call.1} parent=39 // pred_region
        _
      $region44: #{tpu_custom_call.1} parent=39 // pred_fallthru
        _
    $region40: #{tpu_custom_call.1} parent=5 // pred_fallthru
      _
    %p1424 = scmp.le.s32.totalorder 2, %s11
    // Predicated region
    $region45: #{tpu_custom_call.1} parent=5 // pred_check
      %p1425 = pneg %p1424
    $region46: #{tpu_custom_call.1} parent=5 // pred_check_branch
      %1427 = sbr.rel (%p1425) target = $region48
    $region47: #{tpu_custom_call.1} parent=5 // pred_region
      %s1428 = ssub.s32 %s11, 2
      // Predicated region
      $region49: #{tpu_custom_call.1} parent=47 // pred_check
        %p1429 = pneg %p150
      $region50: #{tpu_custom_call.1} parent=47 // pred_check_branch
        %1431 = sbr.rel (%p1429) target = $region52
      $region51: #{tpu_custom_call.1} parent=47 // pred_region
        %p1432 = scmp.lt.s32.totalorder %s17, 1
        %s1433 = scalar_select %p1432, %s17, 1
        %s1434 = smul.addr %s1433, 8
        %s1435 = smul.addr %s1434, 8
        %s1436 = scalar_lea.vmem %s5, %s1435
      $region52: #{tpu_custom_call.1} parent=47 // pred_fallthru
        _
    $region48: #{tpu_custom_call.1} parent=5 // pred_fallthru
      _
  $region6: #{tpu_custom_call.1} parent=0 // loop_footer
    %s15 = sadd.s32 1, %s11
  $region7: #{tpu_custom_call.1} parent=0 // loop_footer_branch
    %10 = sbr.rel target = $region3
  $region8: #{tpu_custom_call.1} parent=0 // loop_exit
    _

</llo_original>
